<compile_context>
chip_gen: v7x
topology: tpu7x:2x2x1
jax: 0.10.0
libtpu: 0.0.40
codegen_flags: <defaults>
</compile_context>

<pallas_src>
import functools

import jax
import jax.numpy as jnp
from jax.experimental import pallas as pl
from jax.experimental.pallas import tpu as pltpu

# ---- constants (deterministic stand-ins for aimnet.constants) ----------------
BOHR = 0.52917726
BOHR_INV = 1.0 / BOHR
HALF_HARTREE = 0.5 * 27.211386245988  # eV per Hartree / 2
MAX_Z = 87

SQRT2 = 2.0 ** 0.5
SQRT3 = 3.0 ** 0.5
QUART3 = 3.0 ** 0.25


def get_r4r2():
    # TODO(synk): real DFT-D3 tabulated sqrt(0.5*<r4>/<r2>*sqrt(Z)) values;
    # using a deterministic synthetic table with the same shape/dtype.
    z = jnp.arange(MAX_Z, dtype=jnp.float32)
    return 2.0 + 0.5 * jnp.sqrt(z)


def _round_up(x, m):
    return (x + m - 1) // m * m


def _pick_tile(n_pad):
    # 256 keeps peak elementwise temporaries (~10 x tile^2 f32) well under the
    # default scoped-VMEM limit on all of v5e/v6e/v7x.
    for t in (256, 128):
        if n_pad >= t and n_pad % t == 0:
            return t
    return n_pad


# ------------------------------- Pallas kernel --------------------------------
# Per-atom feature channels (built in the wrapper):
#   0:x 1:y 2:z (Bohr)  3:alpha  4:p=c6/alpha  5:v=sqrt(2)*c6*mask
#   6:t=sqrt(3)*rr      7:u=3^(1/4)*sqrt(rr)
def _pair_energy(d2, alpha_i, p_i, v_i, t_i, u_i,
                 alpha_j, p_j, v_j, t_j, u_j, a1, a2, s6, s8):
    """Pair dispersion energy from even powers of d only (no sqrt)."""
    d6 = d2 * d2 * d2
    d8 = d6 * d2
    #   denom = c6_i*alpha_j/alpha_i + c6_j*alpha_i/alpha_j = p_i*a_j + p_j*a_i
    denom = jnp.maximum(p_i * alpha_j + p_j * alpha_i, 1e-4)
    c6num = v_i * v_j            # 2*c6_i*c6_j (padding mask folded into v)
    rrij = t_i * t_j             # 3*rr_i*rr_j
    r0 = a1 * (u_i * u_j) + a2   # a1*sqrt(3*rr_i*rr_j) + a2
    r02 = r0 * r0
    r06 = r02 * r02 * r02
    r08 = r06 * r02
    den6 = d6 + r06
    den8 = d8 + r08
    # Two damping terms over a common denominator: one exact division per pair
    # (approx reciprocal rejected to hold the 1e-5/1e-6 tolerance).
    num = s6 * den8 + (s8 * rrij) * den6
    return (c6num * num) / (denom * den6 * den8)


def _d3ts_kernel(params_ref, ai_ref, aj_ref, out_ref, *, ti, tj):
    jt = pl.program_id(1)   # atom-j tile: lane axis, output-resident
    it = pl.program_id(2)   # atom-i tile: sublane axis, grid reduction (last)

    # Accumulator over the i (reduction) grid axis.
    @pl.when(it == 0)
    def _init():
        out_ref[...] = jnp.zeros_like(out_ref)

    a1 = params_ref[0]
    a2 = params_ref[1]
    s6 = params_ref[2]
    s8 = params_ref[3]

    aj = aj_ref[0]                                   # (8, tj) -- lane-dense j feats
    xj, yj, zj = aj[0:1, :], aj[1:2, :], aj[2:3, :]
    alpha_j, p_j, v_j = aj[3:4, :], aj[4:5, :], aj[5:6, :]
    t_j, u_j = aj[6:7, :], aj[7:8, :]

    # e_ij is symmetric -> only compute the upper triangle of tiles; off-diagonal
    # tiles count twice, lower-triangle tiles are skipped entirely.
    @pl.when(it <= jt)
    def _accumulate():
        ai = ai_ref[0]                               # (ti, 8) -- i feats as columns
        xi, yi, zi = ai[:, 0:1], ai[:, 1:2], ai[:, 2:3]
        alpha_i, p_i, v_i = ai[:, 3:4], ai[:, 4:5], ai[:, 5:6]
        t_i, u_i = ai[:, 6:7], ai[:, 7:8]

        dx = xi - xj
        dy = yi - yj
        dz = zi - zj
        d2 = dx * dx + dy * dy + dz * dz             # (ti, tj), coords already Bohr

        e = _pair_energy(d2, alpha_i, p_i, v_i, t_i, u_i,
                         alpha_j, p_j, v_j, t_j, u_j, a1, a2, s6, s8)

        # Sublane reduce -> lane-dense (1, tj) partial; dense vreg accumulate/store.
        colsum = jnp.sum(e, axis=0, keepdims=True)
        w = jnp.where(it == jt, 1.0, 2.0).astype(jnp.float32)
        out_ref[...] = out_ref[...] + (w * colsum)[None]

    # Diagonal tiles were computed without a self-pair mask; subtract the exact
    # self-terms (same op sequence as above at d2 == 0) on one lane-dense row.
    @pl.when(it == jt)
    def _remove_self_pairs():
        d2z = jnp.zeros((1, tj), jnp.float32)
        e_self = _pair_energy(d2z, alpha_j, p_j, v_j, t_j, u_j,
                              alpha_j, p_j, v_j, t_j, u_j, a1, a2, s6, s8)
        out_ref[...] = out_ref[...] - e_self[None]


# --------------------------------- wrapper -------------------------------------
def d3ts_energy(coord, numbers, disp_param, *, a1, a2, s8, s6=1.0):
    """Returns per-molecule dispersion energy, shape (B,) float32."""
    coord = coord.astype(jnp.float32)
    disp_param = disp_param.astype(jnp.float32)
    numbers = numbers.astype(jnp.int32)
    B, N, _ = coord.shape

    n_pad = max(_round_up(N, 128), 128)
    tile = _pick_tile(n_pad)
    pad = n_pad - N

    coord_p = jnp.pad(coord, ((0, 0), (0, pad), (0, 0)))
    numbers_p = jnp.pad(numbers, ((0, 0), (0, pad)))
    disp_p = jnp.pad(disp_param, ((0, 0), (0, pad), (0, 0)))

    # O(N) per-atom precompute (hoists all per-pair sqrt/div except one divide).
    rr = get_r4r2()[numbers_p]                      # (B, Npad)
    c6 = disp_p[..., 0]
    alpha = disp_p[..., 1]
    mask = (numbers_p > 0).astype(jnp.float32)
    alpha_safe = jnp.where(mask > 0.5, alpha, 1.0)  # guard padded atoms

    xyz = coord_p * BOHR_INV                        # Angstrom -> Bohr
    feats = jnp.stack(
        [
            xyz[..., 0], xyz[..., 1], xyz[..., 2],
            alpha,
            c6 / alpha_safe,            # p
            SQRT2 * c6 * mask,          # v (mask folded in -> padded pairs give 0)
            SQRT3 * rr,                 # t
            QUART3 * jnp.sqrt(rr),      # u
        ],
        axis=-1,
    )                                               # (B, Npad, 8)
    feats_t = jnp.transpose(feats, (0, 2, 1))       # (B, 8, Npad)  lane-dense j

    params = jnp.array([a1, a2, s6, s8], jnp.float32)

    kernel = functools.partial(_d3ts_kernel, ti=tile, tj=tile)
    grid = (B, n_pad // tile, n_pad // tile)        # (batch, j-tiles, i-tiles)

    e_atom = pl.pallas_call(
        kernel,
        out_shape=jax.ShapeDtypeStruct((B, 1, n_pad), jnp.float32),
        grid=grid,
        in_specs=[
            pl.BlockSpec(memory_space=pltpu.MemorySpace.SMEM),           # params
            pl.BlockSpec((1, tile, 8), lambda b, jt, it: (b, it, 0)),    # atom i
            pl.BlockSpec((1, 8, tile), lambda b, jt, it: (b, 0, jt)),    # atom j (T)
        ],
        out_specs=pl.BlockSpec((1, 1, tile), lambda b, jt, it: (b, 0, jt)),
        compiler_params=pltpu.CompilerParams(
            dimension_semantics=("parallel", "parallel", "arbitrary")),
    )(params, feats, feats_t)

    # Padded lanes are exactly zero (v=0), so a plain sum gives the molecule energy.
    return -HALF_HARTREE * jnp.sum(e_atom[:, 0, :], axis=-1)


# ------------------------------ pure-JAX reference ------------------------------
def d3ts_reference(coord, numbers, disp_param, *, a1, a2, s8, s6=1.0):
    B, N, _ = coord.shape
    rr = get_r4r2()[numbers]
    c6 = disp_param[..., 0]
    alpha = disp_param[..., 1]
    mask = (numbers > 0).astype(jnp.float32)

    diff = coord[:, :, None, :] - coord[:, None, :, :]
    d_ij = jnp.sqrt(jnp.sum(diff * diff, axis=-1)) * BOHR_INV

    eye = jnp.eye(N, dtype=jnp.float32)[None]
    pair_ok = (mask[:, :, None] * mask[:, None, :] * (1.0 - eye)) > 0.5

    c6_i, c6_j = c6[:, :, None], c6[:, None, :]
    a_i, a_j = alpha[:, :, None], alpha[:, None, :]
    c6ij = 2.0 * c6_i * c6_j / jnp.maximum(c6_i * a_j / a_i + c6_j * a_i / a_j, 1e-4)

    rrij = 3.0 * rr[:, :, None] * rr[:, None, :]
    rrij = jnp.where(pair_ok, rrij, 1.0)
    r0ij = a1 * jnp.sqrt(rrij) + a2

    e_pair = c6ij * (s6 / (d_ij ** 6 + r0ij ** 6) + s8 * rrij / (d_ij ** 8 + r0ij ** 8))
    e_pair = jnp.where(pair_ok, e_pair, 0.0)
    return -HALF_HARTREE * jnp.sum(e_pair, axis=(1, 2))


# ----------------------------------- main ---------------------------------------
if __name__ == "__main__":
    # D3(BJ)-style hyperparameters (e.g. wB97M-D3BJ-ish values).
    a1, a2, s8 = 0.49, 4.6, 2.7

    # Small case (single tile per molecule).
    key = jax.random.PRNGKey(0)
    B, N = 2, 8
    k1, k2, k3 = jax.random.split(key, 3)
    coord = jax.random.normal(k1, (B, N, 3), jnp.float32) * 3.0            # Angstrom
    numbers = jax.random.randint(k2, (B, N), 1, 10)                        # atomic numbers
    disp_param = jax.random.uniform(k3, (B, N, 2), jnp.float32, 0.5, 2.0)  # (c6, alpha) > 0

    e = jax.block_until_ready(
        d3ts_energy(coord, numbers, disp_param, a1=a1, a2=a2, s8=s8))
    e_ref = d3ts_reference(coord, numbers, disp_param, a1=a1, a2=a2, s8=s8)
    assert e.shape == (B,)
    assert jnp.allclose(e, e_ref, rtol=1e-5, atol=1e-6), (e, e_ref)

    # Larger case exercising the multi-tile triangular grid (3x3 tiles of 128).
    B2, N2 = 1, 300
    k4, k5, k6 = jax.random.split(jax.random.PRNGKey(1), 3)
    coord2 = jax.random.normal(k4, (B2, N2, 3), jnp.float32) * 3.0
    numbers2 = jax.random.randint(k5, (B2, N2), 1, 10)
    disp2 = jax.random.uniform(k6, (B2, N2, 2), jnp.float32, 0.5, 2.0)

    e2 = jax.block_until_ready(
        d3ts_energy(coord2, numbers2, disp2, a1=a1, a2=a2, s8=s8))
    e2_ref = d3ts_reference(coord2, numbers2, disp2, a1=a1, a2=a2, s8=s8)
    assert jnp.allclose(e2, e2_ref, rtol=1e-4, atol=1e-5), (e2, e2_ref)

    print("KERNEL_OK")
</pallas_src>

<mosaic_0001>
module attributes {stable_mosaic.version = 11 : i64} {
  func.func @_d3ts_kernel(%arg0: i32, %arg1: i32, %arg2: i32, %arg3: memref<4xf32, #tpu.memory_space<smem>>, %arg4: memref<1x128x8xf32, #tpu.memory_space<vmem>>, %arg5: memref<1x8x128xf32, #tpu.memory_space<vmem>>, %arg6: memref<1x1x128xf32, #tpu.memory_space<vmem>>) attributes {dimension_semantics = [#tpu.dimension_semantics<parallel>, #tpu.dimension_semantics<parallel>, #tpu.dimension_semantics<arbitrary>], iteration_bounds = array<i64: 2, 1, 1>, scalar_prefetch = 0 : i64, scratch_operands = 0 : i64, tpu.core_type = #tpu.core_type<tc>, window_params = [{transform_indices = @transform_0, window_bounds = array<i64: 4>}, {transform_indices = @transform_1, window_bounds = array<i64: 1, 128, 8>}, {transform_indices = @transform_2, window_bounds = array<i64: 1, 8, 128>}, {transform_indices = @transform_3, window_bounds = array<i64: 1, 1, 128>}]} {
    %c0_i32 = arith.constant 0 : i32
    %0 = arith.cmpi eq, %arg2, %c0_i32 : i32
    %1 = arith.extui %0 : i1 to i32
    %c0_i32_0 = arith.constant 0 : i32
    %2 = arith.cmpi ne, %1, %c0_i32_0 : i32
    scf.if %2 {
      %cst = arith.constant 0.000000e+00 : f32
      %23 = vector.broadcast %cst : f32 to vector<1x1x128xf32>
      %c0_6 = arith.constant 0 : index
      %c0_7 = arith.constant 0 : index
      %c0_8 = arith.constant 0 : index
      %24 = vector.load %arg6[%c0_6, %c0_7, %c0_8] : memref<1x1x128xf32, #tpu.memory_space<vmem>>, vector<1x1x128xf32>
      tpu.vector_store %arg6[%c0_6, %c0_7, %c0_8], %23 {strides = array<i32>} : memref<1x1x128xf32, #tpu.memory_space<vmem>>, vector<1x1x128xf32>,
    } else {
    }
    %c0 = arith.constant 0 : index
    %3 = memref.load %arg3[%c0] : memref<4xf32, #tpu.memory_space<smem>>
    %c1 = arith.constant 1 : index
    %4 = memref.load %arg3[%c1] : memref<4xf32, #tpu.memory_space<smem>>
    %c2 = arith.constant 2 : index
    %5 = memref.load %arg3[%c2] : memref<4xf32, #tpu.memory_space<smem>>
    %c3 = arith.constant 3 : index
    %6 = memref.load %arg3[%c3] : memref<4xf32, #tpu.memory_space<smem>>
    %c0_1 = arith.constant 0 : index
    %c0_2 = arith.constant 0 : index
    %c0_3 = arith.constant 0 : index
    %7 = vector.load %arg5[%c0_1, %c0_2, %c0_3] : memref<1x8x128xf32, #tpu.memory_space<vmem>>, vector<1x8x128xf32>
    %8 = vector.shape_cast %7 : vector<1x8x128xf32> to vector<8x128xf32>
    %9 = vector.extract_strided_slice %8 {offsets = [0, 0], sizes = [1, 128], strides = [1, 1]} : vector<8x128xf32> to vector<1x128xf32>
    %10 = vector.extract_strided_slice %8 {offsets = [1, 0], sizes = [1, 128], strides = [1, 1]} : vector<8x128xf32> to vector<1x128xf32>
    %11 = vector.extract_strided_slice %8 {offsets = [2, 0], sizes = [1, 128], strides = [1, 1]} : vector<8x128xf32> to vector<1x128xf32>
    %12 = vector.extract_strided_slice %8 {offsets = [3, 0], sizes = [1, 128], strides = [1, 1]} : vector<8x128xf32> to vector<1x128xf32>
    %13 = vector.extract_strided_slice %8 {offsets = [4, 0], sizes = [1, 128], strides = [1, 1]} : vector<8x128xf32> to vector<1x128xf32>
    %14 = vector.extract_strided_slice %8 {offsets = [5, 0], sizes = [1, 128], strides = [1, 1]} : vector<8x128xf32> to vector<1x128xf32>
    %15 = vector.extract_strided_slice %8 {offsets = [6, 0], sizes = [1, 128], strides = [1, 1]} : vector<8x128xf32> to vector<1x128xf32>
    %16 = vector.extract_strided_slice %8 {offsets = [7, 0], sizes = [1, 128], strides = [1, 1]} : vector<8x128xf32> to vector<1x128xf32>
    %17 = arith.cmpi sle, %arg2, %arg1 : i32
    %18 = arith.extui %17 : i1 to i32
    %c0_i32_4 = arith.constant 0 : i32
    %19 = arith.cmpi ne, %18, %c0_i32_4 : i32
    scf.if %19 {
      %c0_6 = arith.constant 0 : index
      %c0_7 = arith.constant 0 : index
      %c0_8 = arith.constant 0 : index
      %23 = vector.load %arg4[%c0_6, %c0_7, %c0_8] : memref<1x128x8xf32, #tpu.memory_space<vmem>>, vector<1x128x8xf32>
      %24 = vector.shape_cast %23 : vector<1x128x8xf32> to vector<128x8xf32>
      %25 = vector.extract_strided_slice %24 {offsets = [0, 0], sizes = [128, 1], strides = [1, 1]} : vector<128x8xf32> to vector<128x1xf32>
      %26 = vector.extract_strided_slice %24 {offsets = [0, 1], sizes = [128, 1], strides = [1, 1]} : vector<128x8xf32> to vector<128x1xf32>
      %27 = vector.extract_strided_slice %24 {offsets = [0, 2], sizes = [128, 1], strides = [1, 1]} : vector<128x8xf32> to vector<128x1xf32>
      %28 = vector.extract_strided_slice %24 {offsets = [0, 3], sizes = [128, 1], strides = [1, 1]} : vector<128x8xf32> to vector<128x1xf32>
      %29 = vector.extract_strided_slice %24 {offsets = [0, 4], sizes = [128, 1], strides = [1, 1]} : vector<128x8xf32> to vector<128x1xf32>
      %30 = vector.extract_strided_slice %24 {offsets = [0, 5], sizes = [128, 1], strides = [1, 1]} : vector<128x8xf32> to vector<128x1xf32>
      %31 = vector.extract_strided_slice %24 {offsets = [0, 6], sizes = [128, 1], strides = [1, 1]} : vector<128x8xf32> to vector<128x1xf32>
      %32 = vector.extract_strided_slice %24 {offsets = [0, 7], sizes = [128, 1], strides = [1, 1]} : vector<128x8xf32> to vector<128x1xf32>
      %33 = vector.broadcast %25 : vector<128x1xf32> to vector<128x128xf32>
      %34 = vector.broadcast %9 : vector<1x128xf32> to vector<128x128xf32>
      %35 = arith.subf %33, %34 : vector<128x128xf32>
      %36 = vector.broadcast %26 : vector<128x1xf32> to vector<128x128xf32>
      %37 = vector.broadcast %10 : vector<1x128xf32> to vector<128x128xf32>
      %38 = arith.subf %36, %37 : vector<128x128xf32>
      %39 = vector.broadcast %27 : vector<128x1xf32> to vector<128x128xf32>
      %40 = vector.broadcast %11 : vector<1x128xf32> to vector<128x128xf32>
      %41 = arith.subf %39, %40 : vector<128x128xf32>
      %42 = arith.mulf %35, %35 : vector<128x128xf32>
      %43 = arith.mulf %38, %38 : vector<128x128xf32>
      %44 = arith.addf %42, %43 : vector<128x128xf32>
      %45 = arith.mulf %41, %41 : vector<128x128xf32>
      %46 = arith.addf %44, %45 : vector<128x128xf32>
      %47 = arith.mulf %46, %46 : vector<128x128xf32>
      %48 = arith.mulf %47, %46 : vector<128x128xf32>
      %49 = arith.mulf %48, %46 : vector<128x128xf32>
      %50 = vector.broadcast %29 : vector<128x1xf32> to vector<128x128xf32>
      %51 = vector.broadcast %12 : vector<1x128xf32> to vector<128x128xf32>
      %52 = arith.mulf %50, %51 : vector<128x128xf32>
      %53 = vector.broadcast %13 : vector<1x128xf32> to vector<128x128xf32>
      %54 = vector.broadcast %28 : vector<128x1xf32> to vector<128x128xf32>
      %55 = arith.mulf %53, %54 : vector<128x128xf32>
      %56 = arith.addf %52, %55 : vector<128x128xf32>
      %cst = arith.constant 9.99999974E-5 : f32
      %57 = vector.broadcast %cst : f32 to vector<128x128xf32>
      %58 = arith.maximumf %56, %57 : vector<128x128xf32>
      %59 = vector.broadcast %30 : vector<128x1xf32> to vector<128x128xf32>
      %60 = vector.broadcast %14 : vector<1x128xf32> to vector<128x128xf32>
      %61 = arith.mulf %59, %60 : vector<128x128xf32>
      %62 = vector.broadcast %31 : vector<128x1xf32> to vector<128x128xf32>
      %63 = vector.broadcast %15 : vector<1x128xf32> to vector<128x128xf32>
      %64 = arith.mulf %62, %63 : vector<128x128xf32>
      %65 = vector.broadcast %32 : vector<128x1xf32> to vector<128x128xf32>
      %66 = vector.broadcast %16 : vector<1x128xf32> to vector<128x128xf32>
      %67 = arith.mulf %65, %66 : vector<128x128xf32>
      %68 = vector.broadcast %3 : f32 to vector<128x128xf32>
      %69 = arith.mulf %68, %67 : vector<128x128xf32>
      %70 = vector.broadcast %4 : f32 to vector<128x128xf32>
      %71 = arith.addf %69, %70 : vector<128x128xf32>
      %72 = arith.mulf %71, %71 : vector<128x128xf32>
      %73 = arith.mulf %72, %72 : vector<128x128xf32>
      %74 = arith.mulf %73, %72 : vector<128x128xf32>
      %75 = arith.mulf %74, %72 : vector<128x128xf32>
      %76 = arith.addf %48, %74 : vector<128x128xf32>
      %77 = arith.addf %49, %75 : vector<128x128xf32>
      %78 = vector.broadcast %5 : f32 to vector<128x128xf32>
      %79 = arith.mulf %78, %77 : vector<128x128xf32>
      %80 = vector.broadcast %6 : f32 to vector<128x128xf32>
      %81 = arith.mulf %80, %64 : vector<128x128xf32>
      %82 = arith.mulf %81, %76 : vector<128x128xf32>
      %83 = arith.addf %79, %82 : vector<128x128xf32>
      %84 = arith.mulf %61, %83 : vector<128x128xf32>
      %85 = arith.mulf %58, %76 : vector<128x128xf32>
      %86 = arith.mulf %85, %77 : vector<128x128xf32>
      %87 = arith.divf %84, %86 : vector<128x128xf32>
      %cst_9 = arith.constant dense<0.000000e+00> : vector<128xf32>
      %88 = vector.multi_reduction <add>, %87, %cst_9 [0] : vector<128x128xf32> to vector<128xf32>
      %89 = vector.shape_cast %88 : vector<128xf32> to vector<1x128xf32>
      %90 = arith.cmpi eq, %arg2, %arg1 : i32
      %cst_10 = arith.constant 1.000000e+00 : f32
      %cst_11 = arith.constant 2.000000e+00 : f32
      %91 = arith.select %90, %cst_10, %cst_11 : f32
      %c0_12 = arith.constant 0 : index
      %c0_13 = arith.constant 0 : index
      %c0_14 = arith.constant 0 : index
      %92 = vector.load %arg6[%c0_12, %c0_13, %c0_14] : memref<1x1x128xf32, #tpu.memory_space<vmem>>, vector<1x1x128xf32>
      %93 = vector.broadcast %91 : f32 to vector<1x128xf32>
      %94 = arith.mulf %93, %89 : vector<1x128xf32>
      %95 = vector.shape_cast %94 : vector<1x128xf32> to vector<1x1x128xf32>
      %96 = arith.addf %92, %95 : vector<1x1x128xf32>
      %c0_15 = arith.constant 0 : index
      %c0_16 = arith.constant 0 : index
      %c0_17 = arith.constant 0 : index
      %97 = vector.load %arg6[%c0_15, %c0_16, %c0_17] : memref<1x1x128xf32, #tpu.memory_space<vmem>>, vector<1x1x128xf32>
      tpu.vector_store %arg6[%c0_15, %c0_16, %c0_17], %96 {strides = array<i32>} : memref<1x1x128xf32, #tpu.memory_space<vmem>>, vector<1x1x128xf32>,
    } else {
    }
    %20 = arith.cmpi eq, %arg2, %arg1 : i32
    %21 = arith.extui %20 : i1 to i32
    %c0_i32_5 = arith.constant 0 : i32
    %22 = arith.cmpi ne, %21, %c0_i32_5 : i32
    scf.if %22 {
      %cst = arith.constant 0.000000e+00 : f32
      %23 = vector.broadcast %cst : f32 to vector<1x128xf32>
      %24 = arith.mulf %23, %23 : vector<1x128xf32>
      %25 = arith.mulf %24, %23 : vector<1x128xf32>
      %26 = arith.mulf %25, %23 : vector<1x128xf32>
      %27 = arith.mulf %13, %12 : vector<1x128xf32>
      %28 = arith.mulf %13, %12 : vector<1x128xf32>
      %29 = arith.addf %27, %28 : vector<1x128xf32>
      %cst_6 = arith.constant 9.99999974E-5 : f32
      %30 = vector.broadcast %cst_6 : f32 to vector<1x128xf32>
      %31 = arith.maximumf %29, %30 : vector<1x128xf32>
      %32 = arith.mulf %14, %14 : vector<1x128xf32>
      %33 = arith.mulf %15, %15 : vector<1x128xf32>
      %34 = arith.mulf %16, %16 : vector<1x128xf32>
      %35 = vector.broadcast %3 : f32 to vector<1x128xf32>
      %36 = arith.mulf %35, %34 : vector<1x128xf32>
      %37 = vector.broadcast %4 : f32 to vector<1x128xf32>
      %38 = arith.addf %36, %37 : vector<1x128xf32>
      %39 = arith.mulf %38, %38 : vector<1x128xf32>
      %40 = arith.mulf %39, %39 : vector<1x128xf32>
      %41 = arith.mulf %40, %39 : vector<1x128xf32>
      %42 = arith.mulf %41, %39 : vector<1x128xf32>
      %43 = arith.addf %25, %41 : vector<1x128xf32>
      %44 = arith.addf %26, %42 : vector<1x128xf32>
      %45 = vector.broadcast %5 : f32 to vector<1x128xf32>
      %46 = arith.mulf %45, %44 : vector<1x128xf32>
      %47 = vector.broadcast %6 : f32 to vector<1x128xf32>
      %48 = arith.mulf %47, %33 : vector<1x128xf32>
      %49 = arith.mulf %48, %43 : vector<1x128xf32>
      %50 = arith.addf %46, %49 : vector<1x128xf32>
      %51 = arith.mulf %32, %50 : vector<1x128xf32>
      %52 = arith.mulf %31, %43 : vector<1x128xf32>
      %53 = arith.mulf %52, %44 : vector<1x128xf32>
      %54 = arith.divf %51, %53 : vector<1x128xf32>
      %c0_7 = arith.constant 0 : index
      %c0_8 = arith.constant 0 : index
      %c0_9 = arith.constant 0 : index
      %55 = vector.load %arg6[%c0_7, %c0_8, %c0_9] : memref<1x1x128xf32, #tpu.memory_space<vmem>>, vector<1x1x128xf32>
      %56 = vector.shape_cast %54 : vector<1x128xf32> to vector<1x1x128xf32>
      %57 = arith.subf %55, %56 : vector<1x1x128xf32>
      %c0_10 = arith.constant 0 : index
      %c0_11 = arith.constant 0 : index
      %c0_12 = arith.constant 0 : index
      %58 = vector.load %arg6[%c0_10, %c0_11, %c0_12] : memref<1x1x128xf32, #tpu.memory_space<vmem>>, vector<1x1x128xf32>
      tpu.vector_store %arg6[%c0_10, %c0_11, %c0_12], %57 {strides = array<i32>} : memref<1x1x128xf32, #tpu.memory_space<vmem>>, vector<1x1x128xf32>,
    } else {
    }
    return
  }
  func.func @transform_0(%arg0: i32, %arg1: i32, %arg2: i32) -> i32 {
    %c0_i32 = arith.constant 0 : i32
    %c0_i32_0 = arith.constant 0 : i32
    return %c0_i32 : i32
  }
  func.func @transform_1(%arg0: i32, %arg1: i32, %arg2: i32) -> (i32, i32, i32) {
    %c0_i32 = arith.constant 0 : i32
    %c0_i32_0 = arith.constant 0 : i32
    return %arg0, %arg2, %c0_i32 : i32, i32, i32
  }
  func.func @transform_2(%arg0: i32, %arg1: i32, %arg2: i32) -> (i32, i32, i32) {
    %c0_i32 = arith.constant 0 : i32
    %c0_i32_0 = arith.constant 0 : i32
    return %arg0, %c0_i32, %arg1 : i32, i32, i32
  }
  func.func @transform_3(%arg0: i32, %arg1: i32, %arg2: i32) -> (i32, i32, i32) {
    %c0_i32 = arith.constant 0 : i32
    %c0_i32_0 = arith.constant 0 : i32
    return %arg0, %c0_i32, %arg1 : i32, i32, i32
  }
}

</mosaic_0001>

<llo_original>
// kernel: tpu_custom_call.1
$region0: #{tpu_custom_call.1}
  #allocation0 [shape = 'u32[]', space=smem, size = 0x4, offset = 0x4, fixed_abs, tag = 'smem constant byte address 0x4 - core index']
  #allocation1 [shape = 'u32[144,128]{1,0:T(1,128)}', space=vmem, size = 0x12000, scoped, tag = 'internal scratch']
  %s0 = inlined_call_operand.vmem [shape: f32[4], index: 0, kind: input, shape index: {}]
  %s1 = inlined_call_operand.vmem [shape: f32[2,128,8], index: 1, kind: input, shape index: {}]
  %s2 = inlined_call_operand.vmem [shape: f32[2,8,128], index: 2, kind: input, shape index: {}]
  %s3 = inlined_call_operand.hbm [shape: f32[2,1,128], index: 3, kind: output, shape index: {}]
  %s4 = sld [smem:[#allocation0]]
  $region61: #{tpu_custom_call.1} parent=0
    _
  %s6 = ssub.s32 1, %s4
  %s7 = scalar_select 0, %s6, %s4
  $region1: #{tpu_custom_call.1} parent=0
    #allocation2 [shape = 'u8[512]{0}', space=smem, size = 0x200, scoped, tag = 'input window, operand 0, single buffered']
    #allocation3 [shape = 's32[2]{0}', space=sflag, size = 0x8, scoped, tag = 'scoped memory for tpu_custom_call.1']
    #allocation4 [shape = 's32[2]{0}', space=sflag, size = 0x8, scoped, tag = 'scoped memory for tpu_custom_call.1']
    #allocation5 [shape = 'u8[1024]{0}', space=vmem, size = 0x400, scoped, tag = 'output window, operand 0']
    %8 = vsyncpa [#allocation4], 0
    %9 = vsyncpa [#allocation3], 0
    %s10 = scalar_lea.sflag [#allocation3], 1
    %11 = vsyncpa %s10, 0
    loop: start=0, step=1, limit=4
    $region2: #{tpu_custom_call.1} parent=1 // loop_pre_header
      _
    $region3: #{tpu_custom_call.1} parent=1 // loop_header
      %s13 = sphi 0, %s17
      %p14 = scmp.ge.s32.totalorder %s13, 4
      %s20 = sphi 0, %s39
      %s21 = sphi 0, %s35
      %s22 = sphi 0, %s31
      %s23 = sphi 0, %s20
      %s24 = sphi 0, %s21
      %s25 = sphi 0, %s22
      %s26 = sphi 0, %s23
      %s27 = sphi 0, %s24
      %s28 = sphi 0, %s25
      %s40 = sphi 0, %s40
      %s42 = sphi 0, %s40
      %s43 = sphi 0, %s42
      %s57 = sphi 0, %s43
      %s65 = sphi 0, %s67
      %s68 = sphi 0, %s65
      %s69 = sphi 0, %s68
      %s85 = sphi 0, %s69
      %s93 = sphi 0, %s95
      %s96 = sphi 0, %s93
      %s97 = sphi 0, %s96
      %s113 = sphi 0, %s97
      %s121 = sphi 0, %s123
      %s124 = sphi 0, %s121
      %s125 = sphi 0, %s124
      %s141 = sphi 0, %s125
    $region4: #{tpu_custom_call.1} parent=1 // loop_header_branch
      %16 = sbr.rel (%p14) target = $region8
    $region5: #{tpu_custom_call.1} parent=1 // loop_body
      %s18 = ssub.s32 %s13, 1
      %s19 = ssub.s32 %s13, 2
      %s29 = sadd.s32 1, %s22
      %p30 = scmp.ge.s32.totalorder %s29, 1
      %s31 = scalar_select %p30, 0, %s29
      %s32 = sadd.s32 1, %s21
      %s33 = scalar_select %p30, %s32, %s21
      %p34 = scmp.ge.s32.totalorder %s33, 1
      %s35 = scalar_select %p34, 0, %s33
      %s36 = sadd.s32 1, %s20
      %s37 = scalar_select %p34, %s36, %s20
      %p38 = scmp.ge.s32.totalorder %s37, 2
      %s39 = scalar_select %p38, 0, %s37
      %s41 = sadd.s32 %s40, 1
      %p44 = scmp.eq.s32.totalorder %s13, 1
      %p45 = scmp.ne.s32.totalorder %s40, %s42
      %p46 = scmp.eq.s32.totalorder %s13, 0
      %p47 = por %p45, %p46
      %p48 = scmp.ne.s32.totalorder %s40, %s42
      %p49 = scmp.eq.s32.totalorder %s18, 1
      %p50 = por %p48, %p49
      %p51 = scmp.ne.s32.totalorder %s42, %s43
      %p52 = scmp.eq.s32.totalorder %s18, 0
      %p53 = por %p51, %p52
      %p54 = scmp.ne.s32.totalorder %s42, %s43
      %p55 = scmp.eq.s32.totalorder %s19, 1
      %p56 = por %p54, %p55
      %p58 = scmp.ne.s32.totalorder %s43, %s57
      %p59 = scmp.eq.s32.totalorder %s19, 0
      %p60 = por %p58, %p59
      %s61 = ssub.s32 %s20, %s39
      %s62 = ssub.s32 %s22, %s31
      %s63 = sor.u32 %s61, %s62
      %p64 = scmp.eq.s32.totalorder %s63, 0
      %s66 = sadd.s32 %s65, 1
      %s67 = scalar_select %p64, %s65, %s66
      %p70 = pneg %p64
      %p71 = scmp.eq.s32.totalorder %s13, 1
      %p72 = por %p70, %p71
      %p73 = scmp.ne.s32.totalorder %s65, %s68
      %p74 = scmp.eq.s32.totalorder %s13, 0
      %p75 = por %p73, %p74
      %p76 = scmp.ne.s32.totalorder %s65, %s68
      %p77 = scmp.eq.s32.totalorder %s18, 1
      %p78 = por %p76, %p77
      %p79 = scmp.ne.s32.totalorder %s68, %s69
      %p80 = scmp.eq.s32.totalorder %s18, 0
      %p81 = por %p79, %p80
      %p82 = scmp.ne.s32.totalorder %s68, %s69
      %p83 = scmp.eq.s32.totalorder %s19, 1
      %p84 = por %p82, %p83
      %p86 = scmp.ne.s32.totalorder %s69, %s85
      %p87 = scmp.eq.s32.totalorder %s19, 0
      %p88 = por %p86, %p87
      %s89 = ssub.s32 %s20, %s39
      %s90 = ssub.s32 %s21, %s35
      %s91 = sor.u32 %s89, %s90
      %p92 = scmp.eq.s32.totalorder %s91, 0
      %s94 = sadd.s32 %s93, 1
      %s95 = scalar_select %p92, %s93, %s94
      %p98 = pneg %p92
      %p99 = scmp.eq.s32.totalorder %s13, 1
      %p100 = por %p98, %p99
      %p101 = scmp.ne.s32.totalorder %s93, %s96
      %p102 = scmp.eq.s32.totalorder %s13, 0
      %p103 = por %p101, %p102
      %p104 = scmp.ne.s32.totalorder %s93, %s96
      %p105 = scmp.eq.s32.totalorder %s18, 1
      %p106 = por %p104, %p105
      %p107 = scmp.ne.s32.totalorder %s96, %s97
      %p108 = scmp.eq.s32.totalorder %s18, 0
      %p109 = por %p107, %p108
      %p110 = scmp.ne.s32.totalorder %s96, %s97
      %p111 = scmp.eq.s32.totalorder %s19, 1
      %p112 = por %p110, %p111
      %p114 = scmp.ne.s32.totalorder %s97, %s113
      %p115 = scmp.eq.s32.totalorder %s19, 0
      %p116 = por %p114, %p115
      %s117 = ssub.s32 %s20, %s39
      %s118 = ssub.s32 %s21, %s35
      %s119 = sor.u32 %s117, %s118
      %p120 = scmp.eq.s32.totalorder %s119, 0
      %s122 = sadd.s32 %s121, 1
      %s123 = scalar_select %p120, %s121, %s122
      %p126 = pneg %p120
      %p127 = scmp.eq.s32.totalorder %s13, 1
      %p128 = por %p126, %p127
      %p129 = scmp.ne.s32.totalorder %s121, %s124
      %p130 = scmp.eq.s32.totalorder %s13, 0
      %p131 = por %p129, %p130
      %p132 = scmp.ne.s32.totalorder %s121, %s124
      %p133 = scmp.eq.s32.totalorder %s18, 1
      %p134 = por %p132, %p133
      %p135 = scmp.ne.s32.totalorder %s124, %s125
      %p136 = scmp.eq.s32.totalorder %s18, 0
      %p137 = por %p135, %p136
      %p138 = scmp.ne.s32.totalorder %s124, %s125
      %p139 = scmp.eq.s32.totalorder %s19, 1
      %p140 = por %p138, %p139
      %p142 = scmp.ne.s32.totalorder %s125, %s141
      %p143 = scmp.eq.s32.totalorder %s19, 0
      %p144 = por %p142, %p143
      %p145 = scmp.le.s32.totalorder 1, %s13
      %p146 = scmp.lt.s32.totalorder %s13, 3
      %p147 = pnand %p145, %p146
      %p148 = pneg %p147
      // Predicated region
      $region9: #{tpu_custom_call.1} parent=5 // pred_check
        _
      $region10: #{tpu_custom_call.1} parent=5 // pred_check_branch
        %150 = sbr.rel (%p147) target = $region12
      $region11: #{tpu_custom_call.1} parent=5 // pred_region
        %s151 = ssub.s32 %s13, 1
        // Predicated region
        $region13: #{tpu_custom_call.1} parent=11 // pred_check
          %p152 = pneg %p53
        $region14: #{tpu_custom_call.1} parent=11 // pred_check_branch
          %154 = sbr.rel (%p152) target = $region16
        $region15: #{tpu_custom_call.1} parent=11 // pred_region
          %s156 = ssub.s32 16, 16
          %157 = vsyncadd [#allocation4], %s156
          %s159 = sshll.u32 %s0, 4
          %s160 = int_to_ptr.vmem [resolvable:$true] %s159
          %162 = dma.vmem_to_smem %s160, 16, [#allocation2], [#allocation4]
        $region16: #{tpu_custom_call.1} parent=11 // pred_fallthru
          _
      $region12: #{tpu_custom_call.1} parent=5 // pred_fallthru
        _
      %p163 = scmp.lt.s32.totalorder %s13, 2
      // Predicated region
      $region17: #{tpu_custom_call.1} parent=5 // pred_check
        %p164 = pneg %p163
      $region18: #{tpu_custom_call.1} parent=5 // pred_check_branch
        %166 = sbr.rel (%p164) target = $region20
      $region19: #{tpu_custom_call.1} parent=5 // pred_region
        // Predicated region
        $region21: #{tpu_custom_call.1} parent=19 // pred_check
          %p167 = pneg %p75
        $region22: #{tpu_custom_call.1} parent=19 // pred_check_branch
          %169 = sbr.rel (%p167) target = $region24
        $region23: #{tpu_custom_call.1} parent=19 // pred_region
          %s170 = smul.u32 16, %s22
          %p171 = scmp.lt.s32.totalorder %s20, 1
          %s172 = scalar_select %p171, %s20, 1
          %p173 = scmp.lt.s32.totalorder %s170, 15
          %s174 = scalar_select %p173, %s170, 15
          %s175 = smul.addr %s172, 16
          %s176 = sadd.s32 %s174, %s175
          %s177 = smul.addr %s176, 8
          %s178 = scalar_lea.vmem %s1, %s177
          %s179 = smul.u32 16, %s22
        $region24: #{tpu_custom_call.1} parent=19 // pred_fallthru
          _
        // Predicated region
        $region25: #{tpu_custom_call.1} parent=19 // pred_check
          %p180 = pneg %p103
        $region26: #{tpu_custom_call.1} parent=19 // pred_check_branch
          %182 = sbr.rel (%p180) target = $region28
        $region27: #{tpu_custom_call.1} parent=19 // pred_region
          %p183 = scmp.lt.s32.totalorder %s20, 1
          %s184 = scalar_select %p183, %s20, 1
          %p185 = scmp.lt.s32.totalorder %s21, 0
          %s186 = scalar_select %p185, %s21, 0
          %s187 = sadd.s32 %s186, %s184
          %s188 = smul.addr %s187, 8
          %s189 = scalar_lea.vmem %s2, %s188
        $region28: #{tpu_custom_call.1} parent=19 // pred_fallthru
          _
      $region20: #{tpu_custom_call.1} parent=5 // pred_fallthru
        _
      %p190 = scmp.le.s32.totalorder 1, %s13
      %p191 = scmp.lt.s32.totalorder %s13, 3
      %p192 = pnand %p190, %p191
      %p193 = pneg %p192
      // Predicated region
      $region29: #{tpu_custom_call.1} parent=5 // pred_check
        _
      $region30: #{tpu_custom_call.1} parent=5 // pred_check_branch
        %195 = sbr.rel (%p192) target = $region32
      $region31: #{tpu_custom_call.1} parent=5 // pred_region
        %s196 = ssub.s32 %s13, 1
        // Predicated region
        $region33: #{tpu_custom_call.1} parent=31 // pred_check
          %p197 = pneg %p53
        $region34: #{tpu_custom_call.1} parent=31 // pred_check_branch
          %199 = sbr.rel (%p197) target = $region36
        $region35: #{tpu_custom_call.1} parent=31 // pred_region
          %200 = dma.done [#allocation4], 16
        $region36: #{tpu_custom_call.1} parent=31 // pred_fallthru
          _
        %201 = sfence
        %p202 = pneg %p53
        %p203 = pneg %p50
        %s204 = smul.u32 16, %s25
        %p205 = scmp.lt.s32.totalorder %s23, 1
        %s206 = scalar_select %p205, %s23, 1
        %p207 = scmp.lt.s32.totalorder %s204, 15
        %s208 = scalar_select %p207, %s204, 15
        %s209 = smul.addr %s206, 16
        %s210 = sadd.s32 %s208, %s209
        %s211 = smul.addr %s210, 8
        %s212 = scalar_lea.vmem %s1, %s211
        %p213 = pneg %p81
        %p214 = pneg %p78
        %p215 = scmp.lt.s32.totalorder %s23, 1
        %s216 = scalar_select %p215, %s23, 1
        %p217 = scmp.lt.s32.totalorder %s24, 0
        %s218 = scalar_select %p217, %s24, 0
        %s219 = sadd.s32 %s218, %s216
        %s220 = smul.addr %s219, 8
        %s221 = scalar_lea.vmem %s2, %s220
        %p222 = pneg %p109
        %p223 = pneg %p106
        %p224 = pneg %p137
        %p225 = pneg %p134
        %s226 = sand.u32 %s124, 1
        %s227 = scalar_lea.sflag [#allocation3], %s226
        %s228 = sand.u32 %s124, 1
        %s229 = scalar_lea.vmem [#allocation5], %s228
        %s230 = smul.u32 16, %s25
        %p231 = scmp.lt.s32.totalorder %s23, 1
        %s232 = scalar_select %p231, %s23, 1
        %p233 = scmp.lt.s32.totalorder %s230, 15
        %s234 = scalar_select %p233, %s230, 15
        %s235 = smul.addr %s232, 16
        %s236 = sadd.s32 %s234, %s235
        %s237 = smul.addr %s236, 8
        %s238 = scalar_lea.vmem %s1, %s237
        %s239 = smul.u32 16, %s25
        %p240 = scmp.lt.s32.totalorder %s23, 1
        %s241 = scalar_select %p240, %s23, 1
        %p242 = scmp.lt.s32.totalorder %s24, 0
        %s243 = scalar_select %p242, %s24, 0
        %s244 = sadd.s32 %s243, %s241
        %s245 = smul.addr %s244, 8
        %s246 = scalar_lea.vmem %s2, %s245
        %p247 = scmp.eq.s32.totalorder %s25, 0
        // Predicated region
        $region37: #{tpu_custom_call.1} parent=31 // pred_check
          %p248 = pneg %p247
        $region38: #{tpu_custom_call.1} parent=31 // pred_check_branch
          %250 = sbr.rel (%p248) target = $region40
        $region39: #{tpu_custom_call.1} parent=31 // pred_region
          %251 = vst [vmem:[%s229] sm:$0x1] 0.0
        $region40: #{tpu_custom_call.1} parent=31 // pred_fallthru
          _
        %s252 = sld [smem:[#allocation2]]
        %s253 = sld [smem:[#allocation2 + $0x1]]
        %s254 = sld [smem:[#allocation2 + $0x2]]
        %s255 = sld [smem:[#allocation2 + $0x3]]
        %v256 = vld [vmem:[%s246] sm:$0xff]
        %p257 = scmp.le.s32.totalorder %s25, %s24
        // Predicated region
        $region41: #{tpu_custom_call.1} parent=31 // pred_check
          %p258 = pneg %p257
        $region42: #{tpu_custom_call.1} parent=31 // pred_check_branch
          %260 = sbr.rel (%p258) target = $region44
        $region43: #{tpu_custom_call.1} parent=31 // pred_region
          %v261 = vld [vmem:[%s238] sm:$0xff]
          %v262 = vld [vmem:[%s238 + $0x8] sm:$0xff]
          %v263 = vld [vmem:[%s238 + $0x10] sm:$0xff]
          %v264 = vld [vmem:[%s238 + $0x18] sm:$0xff]
          %v265 = vld [vmem:[%s238 + $0x20] sm:$0xff]
          %v266 = vld [vmem:[%s238 + $0x28] sm:$0xff]
          %v267 = vld [vmem:[%s238 + $0x30] sm:$0xff]
          %v268 = vld [vmem:[%s238 + $0x38] sm:$0xff]
          %v269 = vld [vmem:[%s238 + $0x40] sm:$0xff]
          %v270 = vld [vmem:[%s238 + $0x48] sm:$0xff]
          %v271 = vld [vmem:[%s238 + $0x50] sm:$0xff]
          %v272 = vld [vmem:[%s238 + $0x58] sm:$0xff]
          %v273 = vld [vmem:[%s238 + $0x60] sm:$0xff]
          %v274 = vld [vmem:[%s238 + $0x68] sm:$0xff]
          %v275 = vld [vmem:[%s238 + $0x70] sm:$0xff]
          %v276 = vld [vmem:[%s238 + $0x78] sm:$0xff]
          %278 = vset.pattern.permute.xlu0 0
          %279 = vperm.xlu0 %278, %v261
          %v280 = vpop.permute.xlu0 %279
          %283 = vset.pattern.permute.xlu0 0
          %284 = vperm.xlu0 %283, %v262
          %v285 = vpop.permute.xlu0 %284
          %288 = vset.pattern.permute.xlu0 0
          %289 = vperm.xlu0 %288, %v263
          %v290 = vpop.permute.xlu0 %289
          %293 = vset.pattern.permute.xlu0 0
          %294 = vperm.xlu0 %293, %v264
          %v295 = vpop.permute.xlu0 %294
          %298 = vset.pattern.permute.xlu0 0
          %299 = vperm.xlu0 %298, %v265
          %v300 = vpop.permute.xlu0 %299
          %303 = vset.pattern.permute.xlu0 0
          %304 = vperm.xlu0 %303, %v266
          %v305 = vpop.permute.xlu0 %304
          %308 = vset.pattern.permute.xlu0 0
          %309 = vperm.xlu0 %308, %v267
          %v310 = vpop.permute.xlu0 %309
          %313 = vset.pattern.permute.xlu0 0
          %314 = vperm.xlu0 %313, %v268
          %v315 = vpop.permute.xlu0 %314
          %318 = vset.pattern.permute.xlu0 0
          %319 = vperm.xlu0 %318, %v269
          %v320 = vpop.permute.xlu0 %319
          %323 = vset.pattern.permute.xlu0 0
          %324 = vperm.xlu0 %323, %v270
          %v325 = vpop.permute.xlu0 %324
          %328 = vset.pattern.permute.xlu0 0
          %329 = vperm.xlu0 %328, %v271
          %v330 = vpop.permute.xlu0 %329
          %333 = vset.pattern.permute.xlu0 0
          %334 = vperm.xlu0 %333, %v272
          %v335 = vpop.permute.xlu0 %334
          %338 = vset.pattern.permute.xlu0 0
          %339 = vperm.xlu0 %338, %v273
          %v340 = vpop.permute.xlu0 %339
          %343 = vset.pattern.permute.xlu0 0
          %344 = vperm.xlu0 %343, %v274
          %v345 = vpop.permute.xlu0 %344
          %348 = vset.pattern.permute.xlu0 0
          %349 = vperm.xlu0 %348, %v275
          %v350 = vpop.permute.xlu0 %349
          %353 = vset.pattern.permute.xlu0 0
          %354 = vperm.xlu0 %353, %v276
          %v355 = vpop.permute.xlu0 %354
          %v357 = vlaneseq
          %v358 = vshrl.u32 %v357, 7
          %v359 = vsub.s32 0, %v358
          %v360 = vrot.slane %v256, %v359
          %v361 = vsub.f32 %v280, %v360
          %v362 = vsub.f32 %v285, %v360
          %v363 = vsub.f32 %v290, %v360
          %v364 = vsub.f32 %v295, %v360
          %v365 = vsub.f32 %v300, %v360
          %v366 = vsub.f32 %v305, %v360
          %v367 = vsub.f32 %v310, %v360
          %v368 = vsub.f32 %v315, %v360
          %v369 = vsub.f32 %v320, %v360
          %v370 = vsub.f32 %v325, %v360
          %v371 = vsub.f32 %v330, %v360
          %v372 = vsub.f32 %v335, %v360
          %v373 = vsub.f32 %v340, %v360
          %v374 = vsub.f32 %v345, %v360
          %v375 = vsub.f32 %v350, %v360
          %v376 = vsub.f32 %v355, %v360
          %377 = vset.pattern.permute.xlu0 1
          %378 = vperm.xlu0 %377, %v261
          %v379 = vpop.permute.xlu0 %378
          %381 = vset.pattern.permute.xlu0 1
          %382 = vperm.xlu0 %381, %v262
          %v383 = vpop.permute.xlu0 %382
          %385 = vset.pattern.permute.xlu0 1
          %386 = vperm.xlu0 %385, %v263
          %v387 = vpop.permute.xlu0 %386
          %389 = vset.pattern.permute.xlu0 1
          %390 = vperm.xlu0 %389, %v264
          %v391 = vpop.permute.xlu0 %390
          %393 = vset.pattern.permute.xlu0 1
          %394 = vperm.xlu0 %393, %v265
          %v395 = vpop.permute.xlu0 %394
          %397 = vset.pattern.permute.xlu0 1
          %398 = vperm.xlu0 %397, %v266
          %v399 = vpop.permute.xlu0 %398
          %401 = vset.pattern.permute.xlu0 1
          %402 = vperm.xlu0 %401, %v267
          %v403 = vpop.permute.xlu0 %402
          %405 = vset.pattern.permute.xlu0 1
          %406 = vperm.xlu0 %405, %v268
          %v407 = vpop.permute.xlu0 %406
          %409 = vset.pattern.permute.xlu0 1
          %410 = vperm.xlu0 %409, %v269
          %v411 = vpop.permute.xlu0 %410
          %413 = vset.pattern.permute.xlu0 1
          %414 = vperm.xlu0 %413, %v270
          %v415 = vpop.permute.xlu0 %414
          %417 = vset.pattern.permute.xlu0 1
          %418 = vperm.xlu0 %417, %v271
          %v419 = vpop.permute.xlu0 %418
          %421 = vset.pattern.permute.xlu0 1
          %422 = vperm.xlu0 %421, %v272
          %v423 = vpop.permute.xlu0 %422
          %425 = vset.pattern.permute.xlu0 1
          %426 = vperm.xlu0 %425, %v273
          %v427 = vpop.permute.xlu0 %426
          %429 = vset.pattern.permute.xlu0 1
          %430 = vperm.xlu0 %429, %v274
          %v431 = vpop.permute.xlu0 %430
          %433 = vset.pattern.permute.xlu0 1
          %434 = vperm.xlu0 %433, %v275
          %v435 = vpop.permute.xlu0 %434
          %437 = vset.pattern.permute.xlu0 1
          %438 = vperm.xlu0 %437, %v276
          %v439 = vpop.permute.xlu0 %438
          %v441 = vlaneseq
          %v442 = vshrl.u32 %v441, 7
          %v443 = vsub.s32 1, %v442
          %v444 = vrot.slane %v256, %v443
          %v445 = vsub.f32 %v379, %v444
          %v446 = vsub.f32 %v383, %v444
          %v447 = vsub.f32 %v387, %v444
          %v448 = vsub.f32 %v391, %v444
          %v449 = vsub.f32 %v395, %v444
          %v450 = vsub.f32 %v399, %v444
          %v451 = vsub.f32 %v403, %v444
          %v452 = vsub.f32 %v407, %v444
          %v453 = vsub.f32 %v411, %v444
          %v454 = vsub.f32 %v415, %v444
          %v455 = vsub.f32 %v419, %v444
          %v456 = vsub.f32 %v423, %v444
          %v457 = vsub.f32 %v427, %v444
          %v458 = vsub.f32 %v431, %v444
          %v459 = vsub.f32 %v435, %v444
          %v460 = vsub.f32 %v439, %v444
          %461 = vset.pattern.permute.xlu0 2
          %462 = vperm.xlu0 %461, %v261
          %v463 = vpop.permute.xlu0 %462
          %465 = vset.pattern.permute.xlu0 2
          %466 = vperm.xlu0 %465, %v262
          %v467 = vpop.permute.xlu0 %466
          %469 = vset.pattern.permute.xlu0 2
          %470 = vperm.xlu0 %469, %v263
          %v471 = vpop.permute.xlu0 %470
          %473 = vset.pattern.permute.xlu0 2
          %474 = vperm.xlu0 %473, %v264
          %v475 = vpop.permute.xlu0 %474
          %477 = vset.pattern.permute.xlu0 2
          %478 = vperm.xlu0 %477, %v265
          %v479 = vpop.permute.xlu0 %478
          %481 = vset.pattern.permute.xlu0 2
          %482 = vperm.xlu0 %481, %v266
          %v483 = vpop.permute.xlu0 %482
          %485 = vset.pattern.permute.xlu0 2
          %486 = vperm.xlu0 %485, %v267
          %v487 = vpop.permute.xlu0 %486
          %489 = vset.pattern.permute.xlu0 2
          %490 = vperm.xlu0 %489, %v268
          %v491 = vpop.permute.xlu0 %490
          %493 = vset.pattern.permute.xlu0 2
          %494 = vperm.xlu0 %493, %v269
          %v495 = vpop.permute.xlu0 %494
          %497 = vset.pattern.permute.xlu0 2
          %498 = vperm.xlu0 %497, %v270
          %v499 = vpop.permute.xlu0 %498
          %501 = vset.pattern.permute.xlu0 2
          %502 = vperm.xlu0 %501, %v271
          %v503 = vpop.permute.xlu0 %502
          %505 = vset.pattern.permute.xlu0 2
          %506 = vperm.xlu0 %505, %v272
          %v507 = vpop.permute.xlu0 %506
          %509 = vset.pattern.permute.xlu0 2
          %510 = vperm.xlu0 %509, %v273
          %v511 = vpop.permute.xlu0 %510
          %513 = vset.pattern.permute.xlu0 2
          %514 = vperm.xlu0 %513, %v274
          %v515 = vpop.permute.xlu0 %514
          %517 = vset.pattern.permute.xlu0 2
          %518 = vperm.xlu0 %517, %v275
          %v519 = vpop.permute.xlu0 %518
          %521 = vset.pattern.permute.xlu0 2
          %522 = vperm.xlu0 %521, %v276
          %v523 = vpop.permute.xlu0 %522
          %v525 = vlaneseq
          %v526 = vshrl.u32 %v525, 7
          %v527 = vsub.s32 2, %v526
          %v528 = vrot.slane %v256, %v527
          %v529 = vsub.f32 %v463, %v528
          %v530 = vsub.f32 %v467, %v528
          %v531 = vsub.f32 %v471, %v528
          %v532 = vsub.f32 %v475, %v528
          %v533 = vsub.f32 %v479, %v528
          %v534 = vsub.f32 %v483, %v528
          %v535 = vsub.f32 %v487, %v528
          %v536 = vsub.f32 %v491, %v528
          %v537 = vsub.f32 %v495, %v528
          %v538 = vsub.f32 %v499, %v528
          %v539 = vsub.f32 %v503, %v528
          %v540 = vsub.f32 %v507, %v528
          %v541 = vsub.f32 %v511, %v528
          %v542 = vsub.f32 %v515, %v528
          %v543 = vsub.f32 %v519, %v528
          %v544 = vsub.f32 %v523, %v528
          %v545 = vmul.f32 %v361, %v361
          %v546 = vmul.f32 %v362, %v362
          %v547 = vmul.f32 %v363, %v363
          %v548 = vmul.f32 %v364, %v364
          %v549 = vmul.f32 %v365, %v365
          %v550 = vmul.f32 %v366, %v366
          %v551 = vmul.f32 %v367, %v367
          %v552 = vmul.f32 %v368, %v368
          %v553 = vmul.f32 %v369, %v369
          %v554 = vmul.f32 %v370, %v370
          %v555 = vmul.f32 %v371, %v371
          %v556 = vmul.f32 %v372, %v372
          %v557 = vmul.f32 %v373, %v373
          %v558 = vmul.f32 %v374, %v374
          %v559 = vmul.f32 %v375, %v375
          %v560 = vmul.f32 %v376, %v376
          %v561 = vmul.f32 %v445, %v445
          %v562 = vmul.f32 %v446, %v446
          %v563 = vmul.f32 %v447, %v447
          %v564 = vmul.f32 %v448, %v448
          %v565 = vmul.f32 %v449, %v449
          %v566 = vmul.f32 %v450, %v450
          %v567 = vmul.f32 %v451, %v451
          %v568 = vmul.f32 %v452, %v452
          %v569 = vmul.f32 %v453, %v453
          %v570 = vmul.f32 %v454, %v454
          %v571 = vmul.f32 %v455, %v455
          %v572 = vmul.f32 %v456, %v456
          %v573 = vmul.f32 %v457, %v457
          %v574 = vmul.f32 %v458, %v458
          %v575 = vmul.f32 %v459, %v459
          %v576 = vmul.f32 %v460, %v460
          %v577 = vadd.f32 %v545, %v561
          %v578 = vadd.f32 %v546, %v562
          %v579 = vadd.f32 %v547, %v563
          %v580 = vadd.f32 %v548, %v564
          %v581 = vadd.f32 %v549, %v565
          %v582 = vadd.f32 %v550, %v566
          %v583 = vadd.f32 %v551, %v567
          %v584 = vadd.f32 %v552, %v568
          %v585 = vadd.f32 %v553, %v569
          %v586 = vadd.f32 %v554, %v570
          %v587 = vadd.f32 %v555, %v571
          %v588 = vadd.f32 %v556, %v572
          %v589 = vadd.f32 %v557, %v573
          %v590 = vadd.f32 %v558, %v574
          %v591 = vadd.f32 %v559, %v575
          %v592 = vadd.f32 %v560, %v576
          %v593 = vmul.f32 %v529, %v529
          %v594 = vmul.f32 %v530, %v530
          %v595 = vmul.f32 %v531, %v531
          %v596 = vmul.f32 %v532, %v532
          %v597 = vmul.f32 %v533, %v533
          %v598 = vmul.f32 %v534, %v534
          %v599 = vmul.f32 %v535, %v535
          %v600 = vmul.f32 %v536, %v536
          %v601 = vmul.f32 %v537, %v537
          %v602 = vmul.f32 %v538, %v538
          %v603 = vmul.f32 %v539, %v539
          %v604 = vmul.f32 %v540, %v540
          %v605 = vmul.f32 %v541, %v541
          %v606 = vmul.f32 %v542, %v542
          %v607 = vmul.f32 %v543, %v543
          %v608 = vmul.f32 %v544, %v544
          %v609 = vadd.f32 %v577, %v593
          %v610 = vadd.f32 %v578, %v594
          %v611 = vadd.f32 %v579, %v595
          %v612 = vadd.f32 %v580, %v596
          %v613 = vadd.f32 %v581, %v597
          %v614 = vadd.f32 %v582, %v598
          %v615 = vadd.f32 %v583, %v599
          %v616 = vadd.f32 %v584, %v600
          %v617 = vadd.f32 %v585, %v601
          %v618 = vadd.f32 %v586, %v602
          %v619 = vadd.f32 %v587, %v603
          %v620 = vadd.f32 %v588, %v604
          %v621 = vadd.f32 %v589, %v605
          %v622 = vadd.f32 %v590, %v606
          %v623 = vadd.f32 %v591, %v607
          %v624 = vadd.f32 %v592, %v608
          %v625 = vmul.f32 %v609, %v609
          %v626 = vmul.f32 %v610, %v610
          %v627 = vmul.f32 %v611, %v611
          %v628 = vmul.f32 %v612, %v612
          %v629 = vmul.f32 %v613, %v613
          %v630 = vmul.f32 %v614, %v614
          %v631 = vmul.f32 %v615, %v615
          %v632 = vmul.f32 %v616, %v616
          %v633 = vmul.f32 %v617, %v617
          %v634 = vmul.f32 %v618, %v618
          %v635 = vmul.f32 %v619, %v619
          %v636 = vmul.f32 %v620, %v620
          %v637 = vmul.f32 %v621, %v621
          %v638 = vmul.f32 %v622, %v622
          %v639 = vmul.f32 %v623, %v623
          %v640 = vmul.f32 %v624, %v624
          %v641 = vmul.f32 %v625, %v609
          %v642 = vmul.f32 %v626, %v610
          %v643 = vmul.f32 %v627, %v611
          %v644 = vmul.f32 %v628, %v612
          %v645 = vmul.f32 %v629, %v613
          %v646 = vmul.f32 %v630, %v614
          %v647 = vmul.f32 %v631, %v615
          %v648 = vmul.f32 %v632, %v616
          %v649 = vmul.f32 %v633, %v617
          %v650 = vmul.f32 %v634, %v618
          %v651 = vmul.f32 %v635, %v619
          %v652 = vmul.f32 %v636, %v620
          %v653 = vmul.f32 %v637, %v621
          %v654 = vmul.f32 %v638, %v622
          %v655 = vmul.f32 %v639, %v623
          %v656 = vmul.f32 %v640, %v624
          %v657 = vmul.f32 %v641, %v609
          %v658 = vmul.f32 %v642, %v610
          %v659 = vmul.f32 %v643, %v611
          %v660 = vmul.f32 %v644, %v612
          %v661 = vmul.f32 %v645, %v613
          %v662 = vmul.f32 %v646, %v614
          %v663 = vmul.f32 %v647, %v615
          %v664 = vmul.f32 %v648, %v616
          %v665 = vmul.f32 %v649, %v617
          %v666 = vmul.f32 %v650, %v618
          %v667 = vmul.f32 %v651, %v619
          %v668 = vmul.f32 %v652, %v620
          %v669 = vmul.f32 %v653, %v621
          %v670 = vmul.f32 %v654, %v622
          %v671 = vmul.f32 %v655, %v623
          %v672 = vmul.f32 %v656, %v624
          %673 = vset.pattern.permute.xlu0 4
          %674 = vperm.xlu0 %673, %v261
          %v675 = vpop.permute.xlu0 %674
          %677 = vset.pattern.permute.xlu0 4
          %678 = vperm.xlu0 %677, %v262
          %v679 = vpop.permute.xlu0 %678
          %681 = vset.pattern.permute.xlu0 4
          %682 = vperm.xlu0 %681, %v263
          %v683 = vpop.permute.xlu0 %682
          %685 = vset.pattern.permute.xlu0 4
          %686 = vperm.xlu0 %685, %v264
          %v687 = vpop.permute.xlu0 %686
          %689 = vset.pattern.permute.xlu0 4
          %690 = vperm.xlu0 %689, %v265
          %v691 = vpop.permute.xlu0 %690
          %693 = vset.pattern.permute.xlu0 4
          %694 = vperm.xlu0 %693, %v266
          %v695 = vpop.permute.xlu0 %694
          %697 = vset.pattern.permute.xlu0 4
          %698 = vperm.xlu0 %697, %v267
          %v699 = vpop.permute.xlu0 %698
          %701 = vset.pattern.permute.xlu0 4
          %702 = vperm.xlu0 %701, %v268
          %v703 = vpop.permute.xlu0 %702
          %705 = vset.pattern.permute.xlu0 4
          %706 = vperm.xlu0 %705, %v269
          %v707 = vpop.permute.xlu0 %706
          %709 = vset.pattern.permute.xlu0 4
          %710 = vperm.xlu0 %709, %v270
          %v711 = vpop.permute.xlu0 %710
          %713 = vset.pattern.permute.xlu0 4
          %714 = vperm.xlu0 %713, %v271
          %v715 = vpop.permute.xlu0 %714
          %717 = vset.pattern.permute.xlu0 4
          %718 = vperm.xlu0 %717, %v272
          %v719 = vpop.permute.xlu0 %718
          %721 = vset.pattern.permute.xlu0 4
          %722 = vperm.xlu0 %721, %v273
          %v723 = vpop.permute.xlu0 %722
          %725 = vset.pattern.permute.xlu0 4
          %726 = vperm.xlu0 %725, %v274
          %v727 = vpop.permute.xlu0 %726
          %729 = vset.pattern.permute.xlu0 4
          %730 = vperm.xlu0 %729, %v275
          %v731 = vpop.permute.xlu0 %730
          %733 = vset.pattern.permute.xlu0 4
          %734 = vperm.xlu0 %733, %v276
          %v735 = vpop.permute.xlu0 %734
          %v737 = vlaneseq
          %v738 = vshrl.u32 %v737, 7
          %v739 = vsub.s32 3, %v738
          %v740 = vrot.slane %v256, %v739
          %v741 = vmul.f32 %v675, %v740
          %v742 = vmul.f32 %v679, %v740
          %v743 = vmul.f32 %v683, %v740
          %v744 = vmul.f32 %v687, %v740
          %v745 = vmul.f32 %v691, %v740
          %v746 = vmul.f32 %v695, %v740
          %v747 = vmul.f32 %v699, %v740
          %v748 = vmul.f32 %v703, %v740
          %v749 = vmul.f32 %v707, %v740
          %v750 = vmul.f32 %v711, %v740
          %v751 = vmul.f32 %v715, %v740
          %v752 = vmul.f32 %v719, %v740
          %v753 = vmul.f32 %v723, %v740
          %v754 = vmul.f32 %v727, %v740
          %v755 = vmul.f32 %v731, %v740
          %v756 = vmul.f32 %v735, %v740
          %v757 = vlaneseq
          %v758 = vshrl.u32 %v757, 7
          %v759 = vsub.s32 4, %v758
          %v760 = vrot.slane %v256, %v759
          %761 = vset.pattern.permute.xlu0 3
          %762 = vperm.xlu0 %761, %v261
          %v763 = vpop.permute.xlu0 %762
          %765 = vset.pattern.permute.xlu0 3
          %766 = vperm.xlu0 %765, %v262
          %v767 = vpop.permute.xlu0 %766
          %769 = vset.pattern.permute.xlu0 3
          %770 = vperm.xlu0 %769, %v263
          %v771 = vpop.permute.xlu0 %770
          %773 = vset.pattern.permute.xlu0 3
          %774 = vperm.xlu0 %773, %v264
          %v775 = vpop.permute.xlu0 %774
          %777 = vset.pattern.permute.xlu0 3
          %778 = vperm.xlu0 %777, %v265
          %v779 = vpop.permute.xlu0 %778
          %781 = vset.pattern.permute.xlu0 3
          %782 = vperm.xlu0 %781, %v266
          %v783 = vpop.permute.xlu0 %782
          %785 = vset.pattern.permute.xlu0 3
          %786 = vperm.xlu0 %785, %v267
          %v787 = vpop.permute.xlu0 %786
          %789 = vset.pattern.permute.xlu0 3
          %790 = vperm.xlu0 %789, %v268
          %v791 = vpop.permute.xlu0 %790
          %793 = vset.pattern.permute.xlu0 3
          %794 = vperm.xlu0 %793, %v269
          %v795 = vpop.permute.xlu0 %794
          %797 = vset.pattern.permute.xlu0 3
          %798 = vperm.xlu0 %797, %v270
          %v799 = vpop.permute.xlu0 %798
          %801 = vset.pattern.permute.xlu0 3
          %802 = vperm.xlu0 %801, %v271
          %v803 = vpop.permute.xlu0 %802
          %805 = vset.pattern.permute.xlu0 3
          %806 = vperm.xlu0 %805, %v272
          %v807 = vpop.permute.xlu0 %806
          %809 = vset.pattern.permute.xlu0 3
          %810 = vperm.xlu0 %809, %v273
          %v811 = vpop.permute.xlu0 %810
          %813 = vset.pattern.permute.xlu0 3
          %814 = vperm.xlu0 %813, %v274
          %v815 = vpop.permute.xlu0 %814
          %817 = vset.pattern.permute.xlu0 3
          %818 = vperm.xlu0 %817, %v275
          %v819 = vpop.permute.xlu0 %818
          %821 = vset.pattern.permute.xlu0 3
          %822 = vperm.xlu0 %821, %v276
          %v823 = vpop.permute.xlu0 %822
          %v825 = vmul.f32 %v760, %v763
          %v826 = vmul.f32 %v760, %v767
          %v827 = vmul.f32 %v760, %v771
          %v828 = vmul.f32 %v760, %v775
          %v829 = vmul.f32 %v760, %v779
          %v830 = vmul.f32 %v760, %v783
          %v831 = vmul.f32 %v760, %v787
          %v832 = vmul.f32 %v760, %v791
          %v833 = vmul.f32 %v760, %v795
          %v834 = vmul.f32 %v760, %v799
          %v835 = vmul.f32 %v760, %v803
          %v836 = vmul.f32 %v760, %v807
          %v837 = vmul.f32 %v760, %v811
          %v838 = vmul.f32 %v760, %v815
          %v839 = vmul.f32 %v760, %v819
          %v840 = vmul.f32 %v760, %v823
          %v841 = vadd.f32 %v741, %v825
          %v842 = vadd.f32 %v742, %v826
          %v843 = vadd.f32 %v743, %v827
          %v844 = vadd.f32 %v744, %v828
          %v845 = vadd.f32 %v745, %v829
          %v846 = vadd.f32 %v746, %v830
          %v847 = vadd.f32 %v747, %v831
          %v848 = vadd.f32 %v748, %v832
          %v849 = vadd.f32 %v749, %v833
          %v850 = vadd.f32 %v750, %v834
          %v851 = vadd.f32 %v751, %v835
          %v852 = vadd.f32 %v752, %v836
          %v853 = vadd.f32 %v753, %v837
          %v854 = vadd.f32 %v754, %v838
          %v855 = vadd.f32 %v755, %v839
          %v856 = vadd.f32 %v756, %v840
          %v857 = vmax.f32 %v841, 0.0001
          %v858 = vmax.f32 %v842, 0.0001
          %v859 = vmax.f32 %v843, 0.0001
          %v860 = vmax.f32 %v844, 0.0001
          %v861 = vmax.f32 %v845, 0.0001
          %v862 = vmax.f32 %v846, 0.0001
          %v863 = vmax.f32 %v847, 0.0001
          %v864 = vmax.f32 %v848, 0.0001
          %v865 = vmax.f32 %v849, 0.0001
          %v866 = vmax.f32 %v850, 0.0001
          %v867 = vmax.f32 %v851, 0.0001
          %v868 = vmax.f32 %v852, 0.0001
          %v869 = vmax.f32 %v853, 0.0001
          %v870 = vmax.f32 %v854, 0.0001
          %v871 = vmax.f32 %v855, 0.0001
          %v872 = vmax.f32 %v856, 0.0001
          %873 = vset.pattern.permute.xlu0 5
          %874 = vperm.xlu0 %873, %v261
          %v875 = vpop.permute.xlu0 %874
          %877 = vset.pattern.permute.xlu0 5
          %878 = vperm.xlu0 %877, %v262
          %v879 = vpop.permute.xlu0 %878
          %881 = vset.pattern.permute.xlu0 5
          %882 = vperm.xlu0 %881, %v263
          %v883 = vpop.permute.xlu0 %882
          %885 = vset.pattern.permute.xlu0 5
          %886 = vperm.xlu0 %885, %v264
          %v887 = vpop.permute.xlu0 %886
          %889 = vset.pattern.permute.xlu0 5
          %890 = vperm.xlu0 %889, %v265
          %v891 = vpop.permute.xlu0 %890
          %893 = vset.pattern.permute.xlu0 5
          %894 = vperm.xlu0 %893, %v266
          %v895 = vpop.permute.xlu0 %894
          %897 = vset.pattern.permute.xlu0 5
          %898 = vperm.xlu0 %897, %v267
          %v899 = vpop.permute.xlu0 %898
          %901 = vset.pattern.permute.xlu0 5
          %902 = vperm.xlu0 %901, %v268
          %v903 = vpop.permute.xlu0 %902
          %905 = vset.pattern.permute.xlu0 5
          %906 = vperm.xlu0 %905, %v269
          %v907 = vpop.permute.xlu0 %906
          %909 = vset.pattern.permute.xlu0 5
          %910 = vperm.xlu0 %909, %v270
          %v911 = vpop.permute.xlu0 %910
          %913 = vset.pattern.permute.xlu0 5
          %914 = vperm.xlu0 %913, %v271
          %v915 = vpop.permute.xlu0 %914
          %917 = vset.pattern.permute.xlu0 5
          %918 = vperm.xlu0 %917, %v272
          %v919 = vpop.permute.xlu0 %918
          %921 = vset.pattern.permute.xlu0 5
          %922 = vperm.xlu0 %921, %v273
          %v923 = vpop.permute.xlu0 %922
          %925 = vset.pattern.permute.xlu0 5
          %926 = vperm.xlu0 %925, %v274
          %v927 = vpop.permute.xlu0 %926
          %929 = vset.pattern.permute.xlu0 5
          %930 = vperm.xlu0 %929, %v275
          %v931 = vpop.permute.xlu0 %930
          %933 = vset.pattern.permute.xlu0 5
          %934 = vperm.xlu0 %933, %v276
          %v935 = vpop.permute.xlu0 %934
          %v937 = vlaneseq
          %v938 = vshrl.u32 %v937, 7
          %v939 = vsub.s32 5, %v938
          %v940 = vrot.slane %v256, %v939
          %v941 = vmul.f32 %v875, %v940
          %v942 = vmul.f32 %v879, %v940
          %v943 = vmul.f32 %v883, %v940
          %v944 = vmul.f32 %v887, %v940
          %v945 = vmul.f32 %v891, %v940
          %v946 = vmul.f32 %v895, %v940
          %v947 = vmul.f32 %v899, %v940
          %v948 = vmul.f32 %v903, %v940
          %v949 = vmul.f32 %v907, %v940
          %v950 = vmul.f32 %v911, %v940
          %v951 = vmul.f32 %v915, %v940
          %v952 = vmul.f32 %v919, %v940
          %v953 = vmul.f32 %v923, %v940
          %v954 = vmul.f32 %v927, %v940
          %v955 = vmul.f32 %v931, %v940
          %v956 = vmul.f32 %v935, %v940
          %957 = vset.pattern.permute.xlu0 6
          %958 = vperm.xlu0 %957, %v261
          %v959 = vpop.permute.xlu0 %958
          %961 = vset.pattern.permute.xlu0 6
          %962 = vperm.xlu0 %961, %v262
          %v963 = vpop.permute.xlu0 %962
          %965 = vset.pattern.permute.xlu0 6
          %966 = vperm.xlu0 %965, %v263
          %v967 = vpop.permute.xlu0 %966
          %969 = vset.pattern.permute.xlu0 6
          %970 = vperm.xlu0 %969, %v264
          %v971 = vpop.permute.xlu0 %970
          %973 = vset.pattern.permute.xlu0 6
          %974 = vperm.xlu0 %973, %v265
          %v975 = vpop.permute.xlu0 %974
          %977 = vset.pattern.permute.xlu0 6
          %978 = vperm.xlu0 %977, %v266
          %v979 = vpop.permute.xlu0 %978
          %981 = vset.pattern.permute.xlu0 6
          %982 = vperm.xlu0 %981, %v267
          %v983 = vpop.permute.xlu0 %982
          %985 = vset.pattern.permute.xlu0 6
          %986 = vperm.xlu0 %985, %v268
          %v987 = vpop.permute.xlu0 %986
          %989 = vset.pattern.permute.xlu0 6
          %990 = vperm.xlu0 %989, %v269
          %v991 = vpop.permute.xlu0 %990
          %993 = vset.pattern.permute.xlu0 6
          %994 = vperm.xlu0 %993, %v270
          %v995 = vpop.permute.xlu0 %994
          %997 = vset.pattern.permute.xlu0 6
          %998 = vperm.xlu0 %997, %v271
          %v999 = vpop.permute.xlu0 %998
          %1001 = vset.pattern.permute.xlu0 6
          %1002 = vperm.xlu0 %1001, %v272
          %v1003 = vpop.permute.xlu0 %1002
          %1005 = vset.pattern.permute.xlu0 6
          %1006 = vperm.xlu0 %1005, %v273
          %v1007 = vpop.permute.xlu0 %1006
          %1009 = vset.pattern.permute.xlu0 6
          %1010 = vperm.xlu0 %1009, %v274
          %v1011 = vpop.permute.xlu0 %1010
          %1013 = vset.pattern.permute.xlu0 6
          %1014 = vperm.xlu0 %1013, %v275
          %v1015 = vpop.permute.xlu0 %1014
          %1017 = vset.pattern.permute.xlu0 6
          %1018 = vperm.xlu0 %1017, %v276
          %v1019 = vpop.permute.xlu0 %1018
          %v1021 = vlaneseq
          %v1022 = vshrl.u32 %v1021, 7
          %v1023 = vsub.s32 6, %v1022
          %v1024 = vrot.slane %v256, %v1023
          %v1025 = vmul.f32 %v959, %v1024
          %v1026 = vmul.f32 %v963, %v1024
          %v1027 = vmul.f32 %v967, %v1024
          %v1028 = vmul.f32 %v971, %v1024
          %v1029 = vmul.f32 %v975, %v1024
          %v1030 = vmul.f32 %v979, %v1024
          %v1031 = vmul.f32 %v983, %v1024
          %v1032 = vmul.f32 %v987, %v1024
          %v1033 = vmul.f32 %v991, %v1024
          %v1034 = vmul.f32 %v995, %v1024
          %v1035 = vmul.f32 %v999, %v1024
          %v1036 = vmul.f32 %v1003, %v1024
          %v1037 = vmul.f32 %v1007, %v1024
          %v1038 = vmul.f32 %v1011, %v1024
          %v1039 = vmul.f32 %v1015, %v1024
          %v1040 = vmul.f32 %v1019, %v1024
          %1041 = vset.pattern.permute.xlu0 7
          %1042 = vperm.xlu0 %1041, %v261
          %v1043 = vpop.permute.xlu0 %1042
          %1045 = vset.pattern.permute.xlu0 7
          %1046 = vperm.xlu0 %1045, %v262
          %v1047 = vpop.permute.xlu0 %1046
          %1049 = vset.pattern.permute.xlu0 7
          %1050 = vperm.xlu0 %1049, %v263
          %v1051 = vpop.permute.xlu0 %1050
          %1053 = vset.pattern.permute.xlu0 7
          %1054 = vperm.xlu0 %1053, %v264
          %v1055 = vpop.permute.xlu0 %1054
          %1057 = vset.pattern.permute.xlu0 7
          %1058 = vperm.xlu0 %1057, %v265
          %v1059 = vpop.permute.xlu0 %1058
          %1061 = vset.pattern.permute.xlu0 7
          %1062 = vperm.xlu0 %1061, %v266
          %v1063 = vpop.permute.xlu0 %1062
          %1065 = vset.pattern.permute.xlu0 7
          %1066 = vperm.xlu0 %1065, %v267
          %v1067 = vpop.permute.xlu0 %1066
          %1069 = vset.pattern.permute.xlu0 7
          %1070 = vperm.xlu0 %1069, %v268
          %v1071 = vpop.permute.xlu0 %1070
          %1073 = vset.pattern.permute.xlu0 7
          %1074 = vperm.xlu0 %1073, %v269
          %v1075 = vpop.permute.xlu0 %1074
          %1077 = vset.pattern.permute.xlu0 7
          %1078 = vperm.xlu0 %1077, %v270
          %v1079 = vpop.permute.xlu0 %1078
          %1081 = vset.pattern.permute.xlu0 7
          %1082 = vperm.xlu0 %1081, %v271
          %v1083 = vpop.permute.xlu0 %1082
          %1085 = vset.pattern.permute.xlu0 7
          %1086 = vperm.xlu0 %1085, %v272
          %v1087 = vpop.permute.xlu0 %1086
          %1089 = vset.pattern.permute.xlu0 7
          %1090 = vperm.xlu0 %1089, %v273
          %v1091 = vpop.permute.xlu0 %1090
          %1093 = vset.pattern.permute.xlu0 7
          %1094 = vperm.xlu0 %1093, %v274
          %v1095 = vpop.permute.xlu0 %1094
          %1097 = vset.pattern.permute.xlu0 7
          %1098 = vperm.xlu0 %1097, %v275
          %v1099 = vpop.permute.xlu0 %1098
          %1101 = vset.pattern.permute.xlu0 7
          %1102 = vperm.xlu0 %1101, %v276
          %v1103 = vpop.permute.xlu0 %1102
          %v1105 = vlaneseq
          %v1106 = vshrl.u32 %v1105, 7
          %v1107 = vsub.s32 7, %v1106
          %v1108 = vrot.slane %v256, %v1107
          %v1109 = vmul.f32 %v1043, %v1108
          %v1110 = vmul.f32 %v1047, %v1108
          %v1111 = vmul.f32 %v1051, %v1108
          %v1112 = vmul.f32 %v1055, %v1108
          %v1113 = vmul.f32 %v1059, %v1108
          %v1114 = vmul.f32 %v1063, %v1108
          %v1115 = vmul.f32 %v1067, %v1108
          %v1116 = vmul.f32 %v1071, %v1108
          %v1117 = vmul.f32 %v1075, %v1108
          %v1118 = vmul.f32 %v1079, %v1108
          %v1119 = vmul.f32 %v1083, %v1108
          %v1120 = vmul.f32 %v1087, %v1108
          %v1121 = vmul.f32 %v1091, %v1108
          %v1122 = vmul.f32 %v1095, %v1108
          %v1123 = vmul.f32 %v1099, %v1108
          %v1124 = vmul.f32 %v1103, %v1108
          %v1125 = vstv %s252
          %v1126 = vmul.f32 %v1125, %v1109
          %v1127 = vmul.f32 %v1125, %v1110
          %v1128 = vmul.f32 %v1125, %v1111
          %v1129 = vmul.f32 %v1125, %v1112
          %v1130 = vmul.f32 %v1125, %v1113
          %v1131 = vmul.f32 %v1125, %v1114
          %v1132 = vmul.f32 %v1125, %v1115
          %v1133 = vmul.f32 %v1125, %v1116
          %v1134 = vmul.f32 %v1125, %v1117
          %v1135 = vmul.f32 %v1125, %v1118
          %v1136 = vmul.f32 %v1125, %v1119
          %v1137 = vmul.f32 %v1125, %v1120
          %v1138 = vmul.f32 %v1125, %v1121
          %v1139 = vmul.f32 %v1125, %v1122
          %v1140 = vmul.f32 %v1125, %v1123
          %v1141 = vmul.f32 %v1125, %v1124
          %v1142 = vstv %s253
          %v1143 = vadd.f32 %v1126, %v1142
          %v1144 = vadd.f32 %v1127, %v1142
          %v1145 = vadd.f32 %v1128, %v1142
          %v1146 = vadd.f32 %v1129, %v1142
          %v1147 = vadd.f32 %v1130, %v1142
          %v1148 = vadd.f32 %v1131, %v1142
          %v1149 = vadd.f32 %v1132, %v1142
          %v1150 = vadd.f32 %v1133, %v1142
          %v1151 = vadd.f32 %v1134, %v1142
          %v1152 = vadd.f32 %v1135, %v1142
          %v1153 = vadd.f32 %v1136, %v1142
          %v1154 = vadd.f32 %v1137, %v1142
          %v1155 = vadd.f32 %v1138, %v1142
          %v1156 = vadd.f32 %v1139, %v1142
          %v1157 = vadd.f32 %v1140, %v1142
          %v1158 = vadd.f32 %v1141, %v1142
          %v1159 = vmul.f32 %v1143, %v1143
          %v1160 = vmul.f32 %v1144, %v1144
          %v1161 = vmul.f32 %v1145, %v1145
          %v1162 = vmul.f32 %v1146, %v1146
          %v1163 = vmul.f32 %v1147, %v1147
          %v1164 = vmul.f32 %v1148, %v1148
          %v1165 = vmul.f32 %v1149, %v1149
          %v1166 = vmul.f32 %v1150, %v1150
          %v1167 = vmul.f32 %v1151, %v1151
          %v1168 = vmul.f32 %v1152, %v1152
          %v1169 = vmul.f32 %v1153, %v1153
          %v1170 = vmul.f32 %v1154, %v1154
          %v1171 = vmul.f32 %v1155, %v1155
          %v1172 = vmul.f32 %v1156, %v1156
          %v1173 = vmul.f32 %v1157, %v1157
          %v1174 = vmul.f32 %v1158, %v1158
          %v1175 = vmul.f32 %v1159, %v1159
          %v1176 = vmul.f32 %v1160, %v1160
          %v1177 = vmul.f32 %v1161, %v1161
          %v1178 = vmul.f32 %v1162, %v1162
          %v1179 = vmul.f32 %v1163, %v1163
          %v1180 = vmul.f32 %v1164, %v1164
          %v1181 = vmul.f32 %v1165, %v1165
          %v1182 = vmul.f32 %v1166, %v1166
          %v1183 = vmul.f32 %v1167, %v1167
          %v1184 = vmul.f32 %v1168, %v1168
          %v1185 = vmul.f32 %v1169, %v1169
          %v1186 = vmul.f32 %v1170, %v1170
          %v1187 = vmul.f32 %v1171, %v1171
          %v1188 = vmul.f32 %v1172, %v1172
          %v1189 = vmul.f32 %v1173, %v1173
          %v1190 = vmul.f32 %v1174, %v1174
          %v1191 = vmul.f32 %v1175, %v1159
          %v1192 = vmul.f32 %v1176, %v1160
          %v1193 = vmul.f32 %v1177, %v1161
          %v1194 = vmul.f32 %v1178, %v1162
          %v1195 = vmul.f32 %v1179, %v1163
          %v1196 = vmul.f32 %v1180, %v1164
          %v1197 = vmul.f32 %v1181, %v1165
          %v1198 = vmul.f32 %v1182, %v1166
          %v1199 = vmul.f32 %v1183, %v1167
          %v1200 = vmul.f32 %v1184, %v1168
          %v1201 = vmul.f32 %v1185, %v1169
          %v1202 = vmul.f32 %v1186, %v1170
          %v1203 = vmul.f32 %v1187, %v1171
          %v1204 = vmul.f32 %v1188, %v1172
          %v1205 = vmul.f32 %v1189, %v1173
          %v1206 = vmul.f32 %v1190, %v1174
          %v1207 = vmul.f32 %v1191, %v1159
          %v1208 = vmul.f32 %v1192, %v1160
          %v1209 = vmul.f32 %v1193, %v1161
          %v1210 = vmul.f32 %v1194, %v1162
          %v1211 = vmul.f32 %v1195, %v1163
          %v1212 = vmul.f32 %v1196, %v1164
          %v1213 = vmul.f32 %v1197, %v1165
          %v1214 = vmul.f32 %v1198, %v1166
          %v1215 = vmul.f32 %v1199, %v1167
          %v1216 = vmul.f32 %v1200, %v1168
          %v1217 = vmul.f32 %v1201, %v1169
          %v1218 = vmul.f32 %v1202, %v1170
          %v1219 = vmul.f32 %v1203, %v1171
          %v1220 = vmul.f32 %v1204, %v1172
          %v1221 = vmul.f32 %v1205, %v1173
          %v1222 = vmul.f32 %v1206, %v1174
          %v1223 = vadd.f32 %v641, %v1191
          %v1224 = vadd.f32 %v642, %v1192
          %v1225 = vadd.f32 %v643, %v1193
          %v1226 = vadd.f32 %v644, %v1194
          %v1227 = vadd.f32 %v645, %v1195
          %v1228 = vadd.f32 %v646, %v1196
          %v1229 = vadd.f32 %v647, %v1197
          %v1230 = vadd.f32 %v648, %v1198
          %v1231 = vadd.f32 %v649, %v1199
          %v1232 = vadd.f32 %v650, %v1200
          %v1233 = vadd.f32 %v651, %v1201
          %v1234 = vadd.f32 %v652, %v1202
          %v1235 = vadd.f32 %v653, %v1203
          %v1236 = vadd.f32 %v654, %v1204
          %v1237 = vadd.f32 %v655, %v1205
          %v1238 = vadd.f32 %v656, %v1206
          %v1239 = vadd.f32 %v657, %v1207
          %v1240 = vadd.f32 %v658, %v1208
          %v1241 = vadd.f32 %v659, %v1209
          %v1242 = vadd.f32 %v660, %v1210
          %v1243 = vadd.f32 %v661, %v1211
          %v1244 = vadd.f32 %v662, %v1212
          %v1245 = vadd.f32 %v663, %v1213
          %v1246 = vadd.f32 %v664, %v1214
          %v1247 = vadd.f32 %v665, %v1215
          %v1248 = vadd.f32 %v666, %v1216
          %v1249 = vadd.f32 %v667, %v1217
          %v1250 = vadd.f32 %v668, %v1218
          %v1251 = vadd.f32 %v669, %v1219
          %v1252 = vadd.f32 %v670, %v1220
          %v1253 = vadd.f32 %v671, %v1221
          %v1254 = vadd.f32 %v672, %v1222
          %v1255 = vstv %s254
          %v1256 = vmul.f32 %v1255, %v1239
          %v1257 = vmul.f32 %v1255, %v1240
          %v1258 = vmul.f32 %v1255, %v1241
          %v1259 = vmul.f32 %v1255, %v1242
          %v1260 = vmul.f32 %v1255, %v1243
          %v1261 = vmul.f32 %v1255, %v1244
          %v1262 = vmul.f32 %v1255, %v1245
          %v1263 = vmul.f32 %v1255, %v1246
          %v1264 = vmul.f32 %v1255, %v1247
          %v1265 = vmul.f32 %v1255, %v1248
          %v1266 = vmul.f32 %v1255, %v1249
          %v1267 = vmul.f32 %v1255, %v1250
          %v1268 = vmul.f32 %v1255, %v1251
          %v1269 = vmul.f32 %v1255, %v1252
          %v1270 = vmul.f32 %v1255, %v1253
          %v1271 = vmul.f32 %v1255, %v1254
          %v1272 = vstv %s255
          %v1273 = vmul.f32 %v1272, %v1025
          %v1274 = vmul.f32 %v1272, %v1026
          %v1275 = vmul.f32 %v1272, %v1027
          %v1276 = vmul.f32 %v1272, %v1028
          %v1277 = vmul.f32 %v1272, %v1029
          %v1278 = vmul.f32 %v1272, %v1030
          %v1279 = vmul.f32 %v1272, %v1031
          %v1280 = vmul.f32 %v1272, %v1032
          %v1281 = vmul.f32 %v1272, %v1033
          %v1282 = vmul.f32 %v1272, %v1034
          %v1283 = vmul.f32 %v1272, %v1035
          %v1284 = vmul.f32 %v1272, %v1036
          %v1285 = vmul.f32 %v1272, %v1037
          %v1286 = vmul.f32 %v1272, %v1038
          %v1287 = vmul.f32 %v1272, %v1039
          %v1288 = vmul.f32 %v1272, %v1040
          %v1289 = vmul.f32 %v1273, %v1223
          %v1290 = vmul.f32 %v1274, %v1224
          %v1291 = vmul.f32 %v1275, %v1225
          %v1292 = vmul.f32 %v1276, %v1226
          %v1293 = vmul.f32 %v1277, %v1227
          %v1294 = vmul.f32 %v1278, %v1228
          %v1295 = vmul.f32 %v1279, %v1229
          %v1296 = vmul.f32 %v1280, %v1230
          %v1297 = vmul.f32 %v1281, %v1231
          %v1298 = vmul.f32 %v1282, %v1232
          %v1299 = vmul.f32 %v1283, %v1233
          %v1300 = vmul.f32 %v1284, %v1234
          %v1301 = vmul.f32 %v1285, %v1235
          %v1302 = vmul.f32 %v1286, %v1236
          %v1303 = vmul.f32 %v1287, %v1237
          %v1304 = vmul.f32 %v1288, %v1238
          %v1305 = vadd.f32 %v1256, %v1289
          %v1306 = vadd.f32 %v1257, %v1290
          %v1307 = vadd.f32 %v1258, %v1291
          %v1308 = vadd.f32 %v1259, %v1292
          %v1309 = vadd.f32 %v1260, %v1293
          %v1310 = vadd.f32 %v1261, %v1294
          %v1311 = vadd.f32 %v1262, %v1295
          %v1312 = vadd.f32 %v1263, %v1296
          %v1313 = vadd.f32 %v1264, %v1297
          %v1314 = vadd.f32 %v1265, %v1298
          %v1315 = vadd.f32 %v1266, %v1299
          %v1316 = vadd.f32 %v1267, %v1300
          %v1317 = vadd.f32 %v1268, %v1301
          %v1318 = vadd.f32 %v1269, %v1302
          %v1319 = vadd.f32 %v1270, %v1303
          %v1320 = vadd.f32 %v1271, %v1304
          %v1321 = vmul.f32 %v941, %v1305
          %v1322 = vmul.f32 %v942, %v1306
          %v1323 = vmul.f32 %v943, %v1307
          %v1324 = vmul.f32 %v944, %v1308
          %v1325 = vmul.f32 %v945, %v1309
          %v1326 = vmul.f32 %v946, %v1310
          %v1327 = vmul.f32 %v947, %v1311
          %v1328 = vmul.f32 %v948, %v1312
          %v1329 = vmul.f32 %v949, %v1313
          %v1330 = vmul.f32 %v950, %v1314
          %v1331 = vmul.f32 %v951, %v1315
          %v1332 = vmul.f32 %v952, %v1316
          %v1333 = vmul.f32 %v953, %v1317
          %v1334 = vmul.f32 %v954, %v1318
          %v1335 = vmul.f32 %v955, %v1319
          %v1336 = vmul.f32 %v956, %v1320
          %v1337 = vmul.f32 %v857, %v1223
          %v1338 = vmul.f32 %v858, %v1224
          %v1339 = vmul.f32 %v859, %v1225
          %v1340 = vmul.f32 %v860, %v1226
          %v1341 = vmul.f32 %v861, %v1227
          %v1342 = vmul.f32 %v862, %v1228
          %v1343 = vmul.f32 %v863, %v1229
          %v1344 = vmul.f32 %v864, %v1230
          %v1345 = vmul.f32 %v865, %v1231
          %v1346 = vmul.f32 %v866, %v1232
          %v1347 = vmul.f32 %v867, %v1233
          %v1348 = vmul.f32 %v868, %v1234
          %v1349 = vmul.f32 %v869, %v1235
          %v1350 = vmul.f32 %v870, %v1236
          %v1351 = vmul.f32 %v871, %v1237
          %v1352 = vmul.f32 %v872, %v1238
          %v1353 = vmul.f32 %v1337, %v1239
          %v1354 = vmul.f32 %v1338, %v1240
          %v1355 = vmul.f32 %v1339, %v1241
          %v1356 = vmul.f32 %v1340, %v1242
          %v1357 = vmul.f32 %v1341, %v1243
          %v1358 = vmul.f32 %v1342, %v1244
          %v1359 = vmul.f32 %v1343, %v1245
          %v1360 = vmul.f32 %v1344, %v1246
          %v1361 = vmul.f32 %v1345, %v1247
          %v1362 = vmul.f32 %v1346, %v1248
          %v1363 = vmul.f32 %v1347, %v1249
          %v1364 = vmul.f32 %v1348, %v1250
          %v1365 = vmul.f32 %v1349, %v1251
          %v1366 = vmul.f32 %v1350, %v1252
          %v1367 = vmul.f32 %v1351, %v1253
          %v1368 = vmul.f32 %v1352, %v1254
          %v1369 = vrcp.pop %v1353
          %v1370 = vmul.f32 %v1321, %v1369
          %v1371 = vrcp.pop %v1354
          %v1372 = vmul.f32 %v1322, %v1371
          %v1373 = vrcp.pop %v1355
          %v1374 = vmul.f32 %v1323, %v1373
          %v1375 = vrcp.pop %v1356
          %v1376 = vmul.f32 %v1324, %v1375
          %v1377 = vrcp.pop %v1357
          %v1378 = vmul.f32 %v1325, %v1377
          %v1379 = vrcp.pop %v1358
          %v1380 = vmul.f32 %v1326, %v1379
          %v1381 = vrcp.pop %v1359
          %v1382 = vmul.f32 %v1327, %v1381
          %v1383 = vrcp.pop %v1360
          %v1384 = vmul.f32 %v1328, %v1383
          %v1385 = vrcp.pop %v1361
          %v1386 = vmul.f32 %v1329, %v1385
          %v1387 = vrcp.pop %v1362
          %v1388 = vmul.f32 %v1330, %v1387
          %v1389 = vrcp.pop %v1363
          %v1390 = vmul.f32 %v1331, %v1389
          %v1391 = vrcp.pop %v1364
          %v1392 = vmul.f32 %v1332, %v1391
          %v1393 = vrcp.pop %v1365
          %v1394 = vmul.f32 %v1333, %v1393
          %v1395 = vrcp.pop %v1366
          %v1396 = vmul.f32 %v1334, %v1395
          %v1397 = vrcp.pop %v1367
          %v1398 = vmul.f32 %v1335, %v1397
          %v1399 = vrcp.pop %v1368
          %v1400 = vmul.f32 %v1336, %v1399
          %v1401 = vadd.f32 %v1370, %v1372
          %v1402 = vadd.f32 %v1401, %v1374
          %v1403 = vadd.f32 %v1402, %v1376
          %v1404 = vadd.f32 %v1403, %v1378
          %v1405 = vadd.f32 %v1404, %v1380
          %v1406 = vadd.f32 %v1405, %v1382
          %v1407 = vadd.f32 %v1406, %v1384
          %v1408 = vadd.f32 %v1407, %v1386
          %v1409 = vadd.f32 %v1408, %v1388
          %v1410 = vadd.f32 %v1409, %v1390
          %v1411 = vadd.f32 %v1410, %v1392
          %v1412 = vadd.f32 %v1411, %v1394
          %v1413 = vadd.f32 %v1412, %v1396
          %v1414 = vadd.f32 %v1413, %v1398
          %v1415 = vadd.f32 %v1414, %v1400
          %v1416 = vrot.slane %v1415, 4
          %v1417 = vadd.f32 %v1415, %v1416
          %v1418 = vrot.slane %v1417, 2
          %v1419 = vadd.f32 %v1417, %v1418
          %v1420 = vrot.slane %v1419, 1
          %v1421 = vadd.f32 %v1419, %v1420
          %p1422 = scmp.eq.s32.totalorder %s25, %s24
          %s1423 = scalar_select %p1422, 1.0, 2.0
          %v1424 = vld [vmem:[%s229] sm:$0x1]
          %v1425 = vstv %s1423
          %v1426 = vmul.f32 %v1425, %v1421
          %v1427 = vadd.f32 %v1424, %v1426
          %1428 = vst [vmem:[%s229] sm:$0x1] %v1427
        $region44: #{tpu_custom_call.1} parent=31 // pred_fallthru
          _
        %p1429 = scmp.eq.s32.totalorder %s25, %s24
        // Predicated region
        $region45: #{tpu_custom_call.1} parent=31 // pred_check
          %p1430 = pneg %p1429
        $region46: #{tpu_custom_call.1} parent=31 // pred_check_branch
          %1432 = sbr.rel (%p1430) target = $region48
        $region47: #{tpu_custom_call.1} parent=31 // pred_region
          %v1434 = vrot.slane %v256, 7
          %v1436 = vmul.f32 %v256, %v1434
          %v1437 = vadd.f32 %v1436, %v1436
          %v1438 = vmax.f32 %v1437, 0.0001
          %v1439 = vmul.f32 %v256, %v256
          %v1440 = vstv %s252
          %v1441 = vmul.f32 %v1440, %v1439
          %v1442 = vstv %s253
          %v1443 = vadd.f32 %v1441, %v1442
          %v1444 = vmul.f32 %v1443, %v1443
          %v1445 = vmul.f32 %v1444, %v1444
          %v1446 = vmul.f32 %v1445, %v1444
          %v1447 = vmul.f32 %v1446, %v1444
          %v1448 = vadd.f32 %v1446, 0.0
          %v1449 = vadd.f32 %v1447, 0.0
          %v1450 = vstv %s254
          %v1451 = vmul.f32 %v1450, %v1449
          %v1452 = vstv %s255
          %v1453 = vmul.f32 %v1452, %v1439
          %v1455 = vrot.slane %v1448, 1
          %v1457 = vmul.f32 %v1453, %v1455
          %v1459 = vrot.slane %v1457, 7
          %v1461 = vadd.f32 %v1451, %v1459
          %v1463 = vrot.slane %v1461, 2
          %v1465 = vmul.f32 %v1439, %v1463
          %v1466 = vrot.slane %v1448, 3
          %v1468 = vmul.f32 %v1438, %v1466
          %v1470 = vrot.slane %v1449, 3
          %v1472 = vmul.f32 %v1468, %v1470
          %v1474 = vrot.slane %v1472, 7
          %v1476 = vrcp.pop %v1474
          %v1477 = vmul.f32 %v1465, %v1476
          %v1478 = vld [vmem:[%s229] sm:$0x1]
          %v1480 = vcombine.high %v1477, %v1477
          %v1482 = vunpack.c.l.s4 1966171168
          %v1483 = vunpack.c.0.s8 %v1482
          %v1484 = vlaneseq
          %v1485 = vshrl.u32 %v1484, 7
          %v1486 = vsub.s32 %v1483, %v1485
          %v1487 = vrot.slane %v1480, %v1486
          %v1488 = vcombine.high %v1487, %v1487
          %v1490 = vunpack.c.l.s4 1966171168
          %v1491 = vunpack.c.0.s8 %v1490
          %v1492 = vlaneseq
          %v1493 = vshrl.u32 %v1492, 7
          %v1494 = vsub.s32 %v1491, %v1493
          %v1495 = vrot.slane %v1488, %v1494
          %v1497 = vsub.f32 %v1478, %v1495
          %1498 = vst [vmem:[%s229] sm:$0x1] %v1497
        $region48: #{tpu_custom_call.1} parent=31 // pred_fallthru
          _
        %s1499 = sand.u32 %s124, 1
        %s1500 = scalar_lea.sflag [#allocation3], %s1499
        %s1501 = sand.u32 %s124, 1
        %s1502 = scalar_lea.vmem [#allocation5], %s1501
        // Predicated region
        $region49: #{tpu_custom_call.1} parent=31 // pred_check
          %p1503 = pneg %p134
        $region50: #{tpu_custom_call.1} parent=31 // pred_check_branch
          %1505 = sbr.rel (%p1503) target = $region52
        $region51: #{tpu_custom_call.1} parent=31 // pred_region
          %s1507 = ssub.s32 16, 16
          %1508 = vsyncadd %s1500, %s1507
          %s1509 = sadd.s32 %s24, %s23
          %s1510 = smul.addr %s1509, 16
          %s1511 = scalar_lea.hbm %s3, %s1510
          %s1513 = sshll.u32 %s1502, 4
          %s1514 = int_to_ptr.vmem [resolvable:$true] %s1513
          %1516 = dma.vmem_to_hbm [thread:$0]  %s1514, 16, %s1511, %s1500
        $region52: #{tpu_custom_call.1} parent=31 // pred_fallthru
          _
      $region32: #{tpu_custom_call.1} parent=5 // pred_fallthru
        _
      %p1517 = scmp.le.s32.totalorder 2, %s13
      // Predicated region
      $region53: #{tpu_custom_call.1} parent=5 // pred_check
        %p1518 = pneg %p1517
      $region54: #{tpu_custom_call.1} parent=5 // pred_check_branch
        %1520 = sbr.rel (%p1518) target = $region56
      $region55: #{tpu_custom_call.1} parent=5 // pred_region
        %s1521 = ssub.s32 %s13, 2
        // Predicated region
        $region57: #{tpu_custom_call.1} parent=55 // pred_check
          %p1522 = pneg %p140
        $region58: #{tpu_custom_call.1} parent=55 // pred_check_branch
          %1524 = sbr.rel (%p1522) target = $region60
        $region59: #{tpu_custom_call.1} parent=55 // pred_region
          %s1525 = sand.u32 %s125, 1
          %s1526 = scalar_lea.sflag [#allocation3], %s1525
          %s1527 = sand.u32 %s125, 1
          %s1528 = scalar_lea.vmem [#allocation5], %s1527
          %1529 = dma.done %s1526, 16
        $region60: #{tpu_custom_call.1} parent=55 // pred_fallthru
          _
      $region56: #{tpu_custom_call.1} parent=5 // pred_fallthru
        _
    $region6: #{tpu_custom_call.1} parent=1 // loop_footer
      %s17 = sadd.s32 1, %s13
    $region7: #{tpu_custom_call.1} parent=1 // loop_footer_branch
      %12 = sbr.rel target = $region3
    $region8: #{tpu_custom_call.1} parent=1 // loop_exit
      _
    %1530 = vsyncpa [#allocation3], 1
    %s1531 = scalar_lea.sflag [#allocation3], 1
    %1532 = vsyncpa %s1531, 1
    %1533 = vsyncpa [#allocation4], 1
    %s1534 = scalar_lea.sflag [#allocation4], 1
    %1535 = vsyncpa %s1534, 1

</llo_original>
